<compile_context>
chip_gen: v6e
topology: v6e:2x2x1
jax: 0.10.0
libtpu: 0.0.40
codegen_flags: <defaults>
</compile_context>

<pallas_src>
import functools

import jax
import jax.numpy as jnp
from jax.experimental import pallas as pl
from jax.experimental.pallas import tpu as pltpu


def _shift_hw(x, off):
    """y[:, p] = x[:, p + off] if 0 <= p + off < HW else 0 (off is a static int)."""
    if off == 0:
        return x
    c = x.shape[0]
    zeros = jnp.zeros((c, abs(off)), x.dtype)
    if off > 0:
        return jnp.concatenate([x[:, off:], zeros], axis=1)
    return jnp.concatenate([zeros, x[:, :off]], axis=1)


def _arm_kernel(x_ref, w_ref, s1_ref, b1_ref, wa_ref, s2_ref, b2_ref, o_ref,
                *, width, inv_hw):
    """Fused 3x3 conv + BN + ReLU + global-avg-pool + 1x1 conv + BN + sigmoid gate.

    x_ref : (1, Cin, HW)    flattened (row-major) un-padded image, compute dtype
    w_ref : (9, Cout, Cin)  3x3 conv weight, tap k = dh*3 + dw
    s1/b1 : (Cout, 1)       folded BN scale / bias (main branch), f32
    wa    : (Cout, Cout)    1x1 attention conv weight, f32
    s2/b2 : (Cout, 1)       folded BN scale / bias (attention branch), f32
    o_ref : (1, Cout, HW)   gated output (single lane-dense store)
    """
    x = x_ref[0]                                            # (Cin, HW)
    hw = x.shape[-1]

    # Column index of every flattened position.  The dw!=1 taps need a mask so
    # they do not wrap across a row boundary; the dh boundaries are already
    # zero-filled by _shift_hw (global-end padding), so no row mask is needed.
    col = jax.lax.broadcasted_iota(jnp.int32, (1, hw), 1) % width
    mask_by_dw = {0: col >= 1, 1: None, 2: col <= width - 2}

    acc = None                                              # (Cout, HW) f32
    for dh in range(3):
        for dw in range(3):
            off = (dh - 1) * width + (dw - 1)
            tap = _shift_hw(x, off)                         # (Cin, HW)
            mask = mask_by_dw[dw]
            if mask is not None:
                tap = jnp.where(mask, tap, 0)
            part = jnp.dot(w_ref[dh * 3 + dw], tap,
                           preferred_element_type=jnp.float32)
            acc = part if acc is None else acc + part

    # Folded BN + ReLU (f32 epilogue).
    feat = jnp.maximum(acc * s1_ref[...] + b1_ref[...], 0.0)        # (Cout, HW)

    # Global average pool + 1x1 attention conv + BN + sigmoid — once per image.
    pooled = jnp.sum(feat, axis=-1, keepdims=True) * inv_hw         # (Cout, 1)
    att = jnp.dot(wa_ref[...], pooled, preferred_element_type=jnp.float32)
    att = jax.nn.sigmoid(att * s2_ref[...] + b2_ref[...])           # (Cout, 1)

    o_ref[0] = (feat * att).astype(o_ref.dtype)


def attention_refinement_module(x_nchw, params, *, eps=1e-5,
                                compute_dtype=jnp.bfloat16):
    """Forward of AttentionRefinementModule.  x_nchw: (N, Cin, H, W)."""
    n, cin, h, w = x_nchw.shape
    cout = params["w1"].shape[0]
    hw = h * w

    # Input streamed once, lane-dense: (N, Cin, H*W); taps are built in VMEM.
    x_flat = x_nchw.reshape(n, cin, hw).astype(compute_dtype)

    # w1[o, c, dh, dw] -> w_taps[dh*3+dw, o, c]  (matches in-kernel tap order).
    w_taps = jnp.transpose(params["w1"], (2, 3, 0, 1)).reshape(9, cout, cin)
    w_taps = w_taps.astype(compute_dtype)
    wa = params["wa"][:, :, 0, 0].astype(jnp.float32)                # (Cout, Cout)

    # Inference-mode BatchNorm folding (scale / bias per channel).
    inv1 = params["g1"] / jnp.sqrt(params["v1"] + eps)
    s1 = inv1.reshape(cout, 1).astype(jnp.float32)
    b1 = (params["beta1"] - params["m1"] * inv1).reshape(cout, 1).astype(jnp.float32)
    inv2 = params["g2"] / jnp.sqrt(params["v2"] + eps)
    s2 = inv2.reshape(cout, 1).astype(jnp.float32)
    b2 = (params["beta2"] - params["m2"] * inv2).reshape(cout, 1).astype(jnp.float32)

    # VMEM budget: double-buffered in/out blocks + f32 temporaries + headroom.
    in_bytes = cin * hw * jnp.dtype(compute_dtype).itemsize
    out_bytes = cout * hw * jnp.dtype(x_nchw.dtype).itemsize
    tmp_bytes = (2 * cout + cin) * hw * 4
    est = 2 * (in_bytes + out_bytes) + tmp_bytes + (2 << 20)
    cp_kwargs = {"dimension_semantics": ("parallel",)}
    if est > (32 << 20):
        cp_kwargs["vmem_limit_bytes"] = int(min(est, 64 << 20))  # v7x physical cap

    out_flat = pl.pallas_call(
        functools.partial(_arm_kernel, width=w, inv_hw=1.0 / float(hw)),
        out_shape=jax.ShapeDtypeStruct((n, cout, hw), x_nchw.dtype),
        grid_spec=pltpu.PrefetchScalarGridSpec(
            num_scalar_prefetch=0,
            grid=(n,),
            in_specs=[
                pl.BlockSpec((1, cin, hw), lambda b: (b, 0, 0)),
                pl.BlockSpec((9, cout, cin), lambda b: (0, 0, 0)),
                pl.BlockSpec((cout, 1), lambda b: (0, 0)),
                pl.BlockSpec((cout, 1), lambda b: (0, 0)),
                pl.BlockSpec((cout, cout), lambda b: (0, 0)),
                pl.BlockSpec((cout, 1), lambda b: (0, 0)),
                pl.BlockSpec((cout, 1), lambda b: (0, 0)),
            ],
            out_specs=pl.BlockSpec((1, cout, hw), lambda b: (b, 0, 0)),
        ),
        compiler_params=pltpu.CompilerParams(**cp_kwargs),
    )(x_flat, w_taps, s1, b1, wa, s2, b2)

    # (N, Cout, HW) is already channels-first -> plain reshape back to NCHW.
    return out_flat.reshape(n, cout, h, w)


def _reference(x, params, eps=1e-5):
    """Pure-JAX reference of the PyTorch forward (inference-mode BN)."""
    dn = ("NCHW", "OIHW", "NCHW")
    feat = jax.lax.conv_general_dilated(
        x, params["w1"], (1, 1), ((1, 1), (1, 1)), dimension_numbers=dn,
        precision=jax.lax.Precision.HIGHEST)
    inv1 = (params["g1"] / jnp.sqrt(params["v1"] + eps))[None, :, None, None]
    feat = (feat - params["m1"][None, :, None, None]) * inv1 \
        + params["beta1"][None, :, None, None]
    feat = jnp.maximum(feat, 0.0)
    att = jnp.mean(feat, axis=(2, 3), keepdims=True)
    att = jax.lax.conv_general_dilated(
        att, params["wa"], (1, 1), "VALID", dimension_numbers=dn,
        precision=jax.lax.Precision.HIGHEST)
    inv2 = (params["g2"] / jnp.sqrt(params["v2"] + eps))[None, :, None, None]
    att = (att - params["m2"][None, :, None, None]) * inv2 \
        + params["beta2"][None, :, None, None]
    att = jax.nn.sigmoid(att)
    return feat * att


if __name__ == "__main__":
    in_chan, out_chan = 4, 8
    n, h, w = 2, 16, 16

    key = jax.random.PRNGKey(0)
    kx, kw1, kwa = jax.random.split(key, 3)

    # Deterministic params; kaiming_normal_(a=1) => std = 1/sqrt(fan_in).
    params = {
        "w1": jax.random.normal(kw1, (out_chan, in_chan, 3, 3), jnp.float32)
              * (1.0 / jnp.sqrt(in_chan * 9.0)),
        "wa": jax.random.normal(kwa, (out_chan, out_chan, 1, 1), jnp.float32)
              * (1.0 / jnp.sqrt(float(out_chan))),
        # BatchNorm params at PyTorch init: gamma=1, beta=0, mean=0, var=1.
        "g1": jnp.ones((out_chan,), jnp.float32),
        "beta1": jnp.zeros((out_chan,), jnp.float32),
        "m1": jnp.zeros((out_chan,), jnp.float32),
        "v1": jnp.ones((out_chan,), jnp.float32),
        "g2": jnp.ones((out_chan,), jnp.float32),
        "beta2": jnp.zeros((out_chan,), jnp.float32),
        "m2": jnp.zeros((out_chan,), jnp.float32),
        "v2": jnp.ones((out_chan,), jnp.float32),
    }

    x = jax.random.normal(kx, (n, in_chan, h, w), jnp.float32)
    ref = jax.block_until_ready(_reference(x, params))

    # Exactness check of the fused tap/mask/pool/gate algorithm with f32 operands.
    out_f32 = jax.block_until_ready(
        attention_refinement_module(x, params, compute_dtype=jnp.float32))
    assert out_f32.shape == (n, out_chan, h, w)
    assert jnp.allclose(out_f32, ref, atol=2e-3, rtol=2e-3), (
        "f32 mismatch vs reference: max abs err = %g"
        % float(jnp.max(jnp.abs(out_f32 - ref))))

    # Default perf path: bf16 MXU operands, f32 accumulation + f32 epilogue.
    out_bf16 = jax.block_until_ready(attention_refinement_module(x, params))
    assert jnp.allclose(out_bf16, ref, atol=1e-1, rtol=1e-1), (
        "bf16 mismatch vs reference: max abs err = %g"
        % float(jnp.max(jnp.abs(out_bf16 - ref))))

    print("KERNEL_OK")
</pallas_src>

<mosaic_0001>
module attributes {stable_mosaic.version = 11 : i64} {
  func.func @_arm_kernel(%arg0: i32, %arg1: memref<1x4x256xf32, #tpu.memory_space<vmem>>, %arg2: memref<9x8x4xf32, #tpu.memory_space<vmem>>, %arg3: memref<8x1xf32, #tpu.memory_space<vmem>>, %arg4: memref<8x1xf32, #tpu.memory_space<vmem>>, %arg5: memref<8x8xf32, #tpu.memory_space<vmem>>, %arg6: memref<8x1xf32, #tpu.memory_space<vmem>>, %arg7: memref<8x1xf32, #tpu.memory_space<vmem>>, %arg8: memref<1x8x256xf32, #tpu.memory_space<vmem>>) attributes {dimension_semantics = [#tpu.dimension_semantics<parallel>], iteration_bounds = array<i64: 2>, scalar_prefetch = 0 : i64, scratch_operands = 0 : i64, tpu.core_type = #tpu.core_type<tc>, window_params = [{transform_indices = @transform_0, window_bounds = array<i64: 1, 4, 256>}, {pipeline_mode = #tpu.pipeline_mode<synchronous>, transform_indices = @transform_1, window_bounds = array<i64: 9, 8, 4>}, {pipeline_mode = #tpu.pipeline_mode<synchronous>, transform_indices = @transform_2, window_bounds = array<i64: 8, 1>}, {pipeline_mode = #tpu.pipeline_mode<synchronous>, transform_indices = @transform_3, window_bounds = array<i64: 8, 1>}, {pipeline_mode = #tpu.pipeline_mode<synchronous>, transform_indices = @transform_4, window_bounds = array<i64: 8, 8>}, {pipeline_mode = #tpu.pipeline_mode<synchronous>, transform_indices = @transform_5, window_bounds = array<i64: 8, 1>}, {pipeline_mode = #tpu.pipeline_mode<synchronous>, transform_indices = @transform_6, window_bounds = array<i64: 8, 1>}, {transform_indices = @transform_7, window_bounds = array<i64: 1, 8, 256>}]} {
    %c0 = arith.constant 0 : index
    %c0_0 = arith.constant 0 : index
    %c0_1 = arith.constant 0 : index
    %0 = vector.load %arg1[%c0, %c0_0, %c0_1] : memref<1x4x256xf32, #tpu.memory_space<vmem>>, vector<1x4x256xf32>
    %1 = vector.shape_cast %0 : vector<1x4x256xf32> to vector<4x256xf32>
    %2 = tpu.iota {dimensions = array<i32: 1>} : vector<1x256xi32>
    %c16_i32 = arith.constant 16 : i32
    %c0_i32 = arith.constant 0 : i32
    %3 = arith.cmpi eq, %c16_i32, %c0_i32 : i32
    %c1_i32 = arith.constant 1 : i32
    %4 = arith.select %3, %c1_i32, %c16_i32 : i32
    %5 = vector.broadcast %4 : i32 to vector<1x256xi32>
    %6 = arith.remsi %2, %5 : vector<1x256xi32>
    %c0_i32_2 = arith.constant 0 : i32
    %7 = vector.broadcast %c0_i32_2 : i32 to vector<1x256xi32>
    %8 = arith.cmpi ne, %6, %7 : vector<1x256xi32>
    %c0_i32_3 = arith.constant 0 : i32
    %9 = vector.broadcast %c0_i32_3 : i32 to vector<1x256xi32>
    %10 = arith.cmpi slt, %6, %9 : vector<1x256xi32>
    %c0_i32_4 = arith.constant 0 : i32
    %11 = arith.cmpi slt, %4, %c0_i32_4 : i32
    %12 = vector.broadcast %11 : i1 to vector<1x256xi1>
    %13 = vector.broadcast %12 : vector<1x256xi1> to vector<1x256xi1>
    %14 = arith.xori %10, %13 : vector<1x256xi1>
    %15 = arith.andi %14, %8 : vector<1x256xi1>
    %16 = vector.broadcast %4 : i32 to vector<1x256xi32>
    %17 = arith.addi %6, %16 : vector<1x256xi32>
    %18 = arith.select %15, %17, %6 : vector<1x256xi1>, vector<1x256xi32>
    %c1_i32_5 = arith.constant 1 : i32
    %19 = vector.broadcast %c1_i32_5 : i32 to vector<1x256xi32>
    %20 = arith.cmpi sge, %18, %19 : vector<1x256xi32>
    %c14_i32 = arith.constant 14 : i32
    %21 = vector.broadcast %c14_i32 : i32 to vector<1x256xi32>
    %22 = arith.cmpi sle, %18, %21 : vector<1x256xi32>
    %cst = arith.constant 0.000000e+00 : f32
    %23 = vector.broadcast %cst : f32 to vector<4x17xf32>
    %24 = vector.extract_strided_slice %1 {offsets = [0, 0], sizes = [4, 239], strides = [1, 1]} : vector<4x256xf32> to vector<4x239xf32>
    %25 = tpu.concatenate %23, %24 in 1 : vector<4x17xf32>, vector<4x239xf32> -> vector<4x256xf32>
    %c0_i32_6 = arith.constant 0 : i32
    %26 = arith.sitofp %c0_i32_6 : i32 to f32
    %27 = vector.shape_cast %20 : vector<1x256xi1> to vector<1x256xi1>
    %28 = vector.broadcast %27 : vector<1x256xi1> to vector<4x256xi1>
    %29 = vector.broadcast %26 : f32 to vector<4x256xf32>
    %30 = arith.select %28, %25, %29 : vector<4x256xi1>, vector<4x256xf32>
    %c0_7 = arith.constant 0 : index
    %c0_8 = arith.constant 0 : index
    %c0_9 = arith.constant 0 : index
    %31 = vector.load %arg2[%c0_7, %c0_8, %c0_9] : memref<9x8x4xf32, #tpu.memory_space<vmem>>, vector<1x8x4xf32>
    %32 = vector.shape_cast %31 : vector<1x8x4xf32> to vector<8x4xf32>
    %cst_10 = arith.constant dense<0.000000e+00> : vector<8x256xf32>
    %33 = tpu.matmul %32, %30, %cst_10 {dimension_numbers = #tpu.dot_dimension_numbers<[1], [0], [0], [1], [0, 0, 1, 1], [], []>} : vector<8x4xf32>, vector<4x256xf32>, vector<8x256xf32> -> vector<8x256xf32>
    %cst_11 = arith.constant 0.000000e+00 : f32
    %34 = vector.broadcast %cst_11 : f32 to vector<4x16xf32>
    %35 = vector.extract_strided_slice %1 {offsets = [0, 0], sizes = [4, 240], strides = [1, 1]} : vector<4x256xf32> to vector<4x240xf32>
    %36 = tpu.concatenate %34, %35 in 1 : vector<4x16xf32>, vector<4x240xf32> -> vector<4x256xf32>
    %c1 = arith.constant 1 : index
    %c0_12 = arith.constant 0 : index
    %c0_13 = arith.constant 0 : index
    %37 = vector.load %arg2[%c1, %c0_12, %c0_13] : memref<9x8x4xf32, #tpu.memory_space<vmem>>, vector<1x8x4xf32>
    %38 = vector.shape_cast %37 : vector<1x8x4xf32> to vector<8x4xf32>
    %cst_14 = arith.constant dense<0.000000e+00> : vector<8x256xf32>
    %39 = tpu.matmul %38, %36, %cst_14 {dimension_numbers = #tpu.dot_dimension_numbers<[1], [0], [0], [1], [0, 0, 1, 1], [], []>} : vector<8x4xf32>, vector<4x256xf32>, vector<8x256xf32> -> vector<8x256xf32>
    %40 = arith.addf %33, %39 : vector<8x256xf32>
    %cst_15 = arith.constant 0.000000e+00 : f32
    %41 = vector.broadcast %cst_15 : f32 to vector<4x15xf32>
    %42 = vector.extract_strided_slice %1 {offsets = [0, 0], sizes = [4, 241], strides = [1, 1]} : vector<4x256xf32> to vector<4x241xf32>
    %43 = tpu.concatenate %41, %42 in 1 : vector<4x15xf32>, vector<4x241xf32> -> vector<4x256xf32>
    %c0_i32_16 = arith.constant 0 : i32
    %44 = arith.sitofp %c0_i32_16 : i32 to f32
    %45 = vector.shape_cast %22 : vector<1x256xi1> to vector<1x256xi1>
    %46 = vector.broadcast %45 : vector<1x256xi1> to vector<4x256xi1>
    %47 = vector.broadcast %44 : f32 to vector<4x256xf32>
    %48 = arith.select %46, %43, %47 : vector<4x256xi1>, vector<4x256xf32>
    %c2 = arith.constant 2 : index
    %c0_17 = arith.constant 0 : index
    %c0_18 = arith.constant 0 : index
    %49 = vector.load %arg2[%c2, %c0_17, %c0_18] : memref<9x8x4xf32, #tpu.memory_space<vmem>>, vector<1x8x4xf32>
    %50 = vector.shape_cast %49 : vector<1x8x4xf32> to vector<8x4xf32>
    %cst_19 = arith.constant dense<0.000000e+00> : vector<8x256xf32>
    %51 = tpu.matmul %50, %48, %cst_19 {dimension_numbers = #tpu.dot_dimension_numbers<[1], [0], [0], [1], [0, 0, 1, 1], [], []>} : vector<8x4xf32>, vector<4x256xf32>, vector<8x256xf32> -> vector<8x256xf32>
    %52 = arith.addf %40, %51 : vector<8x256xf32>
    %cst_20 = arith.constant 0.000000e+00 : f32
    %53 = vector.broadcast %cst_20 : f32 to vector<4x1xf32>
    %54 = vector.extract_strided_slice %1 {offsets = [0, 0], sizes = [4, 255], strides = [1, 1]} : vector<4x256xf32> to vector<4x255xf32>
    %55 = tpu.concatenate %53, %54 in 1 : vector<4x1xf32>, vector<4x255xf32> -> vector<4x256xf32>
    %c0_i32_21 = arith.constant 0 : i32
    %56 = arith.sitofp %c0_i32_21 : i32 to f32
    %57 = vector.shape_cast %20 : vector<1x256xi1> to vector<1x256xi1>
    %58 = vector.broadcast %57 : vector<1x256xi1> to vector<4x256xi1>
    %59 = vector.broadcast %56 : f32 to vector<4x256xf32>
    %60 = arith.select %58, %55, %59 : vector<4x256xi1>, vector<4x256xf32>
    %c3 = arith.constant 3 : index
    %c0_22 = arith.constant 0 : index
    %c0_23 = arith.constant 0 : index
    %61 = vector.load %arg2[%c3, %c0_22, %c0_23] : memref<9x8x4xf32, #tpu.memory_space<vmem>>, vector<1x8x4xf32>
    %62 = vector.shape_cast %61 : vector<1x8x4xf32> to vector<8x4xf32>
    %cst_24 = arith.constant dense<0.000000e+00> : vector<8x256xf32>
    %63 = tpu.matmul %62, %60, %cst_24 {dimension_numbers = #tpu.dot_dimension_numbers<[1], [0], [0], [1], [0, 0, 1, 1], [], []>} : vector<8x4xf32>, vector<4x256xf32>, vector<8x256xf32> -> vector<8x256xf32>
    %64 = arith.addf %52, %63 : vector<8x256xf32>
    %c4 = arith.constant 4 : index
    %c0_25 = arith.constant 0 : index
    %c0_26 = arith.constant 0 : index
    %65 = vector.load %arg2[%c4, %c0_25, %c0_26] : memref<9x8x4xf32, #tpu.memory_space<vmem>>, vector<1x8x4xf32>
    %66 = vector.shape_cast %65 : vector<1x8x4xf32> to vector<8x4xf32>
    %cst_27 = arith.constant dense<0.000000e+00> : vector<8x256xf32>
    %67 = tpu.matmul %66, %1, %cst_27 {dimension_numbers = #tpu.dot_dimension_numbers<[1], [0], [0], [1], [0, 0, 1, 1], [], []>} : vector<8x4xf32>, vector<4x256xf32>, vector<8x256xf32> -> vector<8x256xf32>
    %68 = arith.addf %64, %67 : vector<8x256xf32>
    %cst_28 = arith.constant 0.000000e+00 : f32
    %69 = vector.broadcast %cst_28 : f32 to vector<4x1xf32>
    %70 = vector.extract_strided_slice %1 {offsets = [0, 1], sizes = [4, 255], strides = [1, 1]} : vector<4x256xf32> to vector<4x255xf32>
    %71 = tpu.concatenate %70, %69 in 1 : vector<4x255xf32>, vector<4x1xf32> -> vector<4x256xf32>
    %c0_i32_29 = arith.constant 0 : i32
    %72 = arith.sitofp %c0_i32_29 : i32 to f32
    %73 = vector.shape_cast %22 : vector<1x256xi1> to vector<1x256xi1>
    %74 = vector.broadcast %73 : vector<1x256xi1> to vector<4x256xi1>
    %75 = vector.broadcast %72 : f32 to vector<4x256xf32>
    %76 = arith.select %74, %71, %75 : vector<4x256xi1>, vector<4x256xf32>
    %c5 = arith.constant 5 : index
    %c0_30 = arith.constant 0 : index
    %c0_31 = arith.constant 0 : index
    %77 = vector.load %arg2[%c5, %c0_30, %c0_31] : memref<9x8x4xf32, #tpu.memory_space<vmem>>, vector<1x8x4xf32>
    %78 = vector.shape_cast %77 : vector<1x8x4xf32> to vector<8x4xf32>
    %cst_32 = arith.constant dense<0.000000e+00> : vector<8x256xf32>
    %79 = tpu.matmul %78, %76, %cst_32 {dimension_numbers = #tpu.dot_dimension_numbers<[1], [0], [0], [1], [0, 0, 1, 1], [], []>} : vector<8x4xf32>, vector<4x256xf32>, vector<8x256xf32> -> vector<8x256xf32>
    %80 = arith.addf %68, %79 : vector<8x256xf32>
    %cst_33 = arith.constant 0.000000e+00 : f32
    %81 = vector.broadcast %cst_33 : f32 to vector<4x15xf32>
    %82 = vector.extract_strided_slice %1 {offsets = [0, 15], sizes = [4, 241], strides = [1, 1]} : vector<4x256xf32> to vector<4x241xf32>
    %83 = tpu.concatenate %82, %81 in 1 : vector<4x241xf32>, vector<4x15xf32> -> vector<4x256xf32>
    %c0_i32_34 = arith.constant 0 : i32
    %84 = arith.sitofp %c0_i32_34 : i32 to f32
    %85 = vector.shape_cast %20 : vector<1x256xi1> to vector<1x256xi1>
    %86 = vector.broadcast %85 : vector<1x256xi1> to vector<4x256xi1>
    %87 = vector.broadcast %84 : f32 to vector<4x256xf32>
    %88 = arith.select %86, %83, %87 : vector<4x256xi1>, vector<4x256xf32>
    %c6 = arith.constant 6 : index
    %c0_35 = arith.constant 0 : index
    %c0_36 = arith.constant 0 : index
    %89 = vector.load %arg2[%c6, %c0_35, %c0_36] : memref<9x8x4xf32, #tpu.memory_space<vmem>>, vector<1x8x4xf32>
    %90 = vector.shape_cast %89 : vector<1x8x4xf32> to vector<8x4xf32>
    %cst_37 = arith.constant dense<0.000000e+00> : vector<8x256xf32>
    %91 = tpu.matmul %90, %88, %cst_37 {dimension_numbers = #tpu.dot_dimension_numbers<[1], [0], [0], [1], [0, 0, 1, 1], [], []>} : vector<8x4xf32>, vector<4x256xf32>, vector<8x256xf32> -> vector<8x256xf32>
    %92 = arith.addf %80, %91 : vector<8x256xf32>
    %cst_38 = arith.constant 0.000000e+00 : f32
    %93 = vector.broadcast %cst_38 : f32 to vector<4x16xf32>
    %94 = vector.extract_strided_slice %1 {offsets = [0, 16], sizes = [4, 240], strides = [1, 1]} : vector<4x256xf32> to vector<4x240xf32>
    %95 = tpu.concatenate %94, %93 in 1 : vector<4x240xf32>, vector<4x16xf32> -> vector<4x256xf32>
    %c7 = arith.constant 7 : index
    %c0_39 = arith.constant 0 : index
    %c0_40 = arith.constant 0 : index
    %96 = vector.load %arg2[%c7, %c0_39, %c0_40] : memref<9x8x4xf32, #tpu.memory_space<vmem>>, vector<1x8x4xf32>
    %97 = vector.shape_cast %96 : vector<1x8x4xf32> to vector<8x4xf32>
    %cst_41 = arith.constant dense<0.000000e+00> : vector<8x256xf32>
    %98 = tpu.matmul %97, %95, %cst_41 {dimension_numbers = #tpu.dot_dimension_numbers<[1], [0], [0], [1], [0, 0, 1, 1], [], []>} : vector<8x4xf32>, vector<4x256xf32>, vector<8x256xf32> -> vector<8x256xf32>
    %99 = arith.addf %92, %98 : vector<8x256xf32>
    %cst_42 = arith.constant 0.000000e+00 : f32
    %100 = vector.broadcast %cst_42 : f32 to vector<4x17xf32>
    %101 = vector.extract_strided_slice %1 {offsets = [0, 17], sizes = [4, 239], strides = [1, 1]} : vector<4x256xf32> to vector<4x239xf32>
    %102 = tpu.concatenate %101, %100 in 1 : vector<4x239xf32>, vector<4x17xf32> -> vector<4x256xf32>
    %c0_i32_43 = arith.constant 0 : i32
    %103 = arith.sitofp %c0_i32_43 : i32 to f32
    %104 = vector.shape_cast %22 : vector<1x256xi1> to vector<1x256xi1>
    %105 = vector.broadcast %104 : vector<1x256xi1> to vector<4x256xi1>
    %106 = vector.broadcast %103 : f32 to vector<4x256xf32>
    %107 = arith.select %105, %102, %106 : vector<4x256xi1>, vector<4x256xf32>
    %c8 = arith.constant 8 : index
    %c0_44 = arith.constant 0 : index
    %c0_45 = arith.constant 0 : index
    %108 = vector.load %arg2[%c8, %c0_44, %c0_45] : memref<9x8x4xf32, #tpu.memory_space<vmem>>, vector<1x8x4xf32>
    %109 = vector.shape_cast %108 : vector<1x8x4xf32> to vector<8x4xf32>
    %cst_46 = arith.constant dense<0.000000e+00> : vector<8x256xf32>
    %110 = tpu.matmul %109, %107, %cst_46 {dimension_numbers = #tpu.dot_dimension_numbers<[1], [0], [0], [1], [0, 0, 1, 1], [], []>} : vector<8x4xf32>, vector<4x256xf32>, vector<8x256xf32> -> vector<8x256xf32>
    %111 = arith.addf %99, %110 : vector<8x256xf32>
    %c0_47 = arith.constant 0 : index
    %c0_48 = arith.constant 0 : index
    %112 = vector.load %arg3[%c0_47, %c0_48] : memref<8x1xf32, #tpu.memory_space<vmem>>, vector<8x1xf32>
    %113 = vector.broadcast %112 : vector<8x1xf32> to vector<8x256xf32>
    %114 = arith.mulf %111, %113 : vector<8x256xf32>
    %c0_49 = arith.constant 0 : index
    %c0_50 = arith.constant 0 : index
    %115 = vector.load %arg4[%c0_49, %c0_50] : memref<8x1xf32, #tpu.memory_space<vmem>>, vector<8x1xf32>
    %116 = vector.broadcast %115 : vector<8x1xf32> to vector<8x256xf32>
    %117 = arith.addf %114, %116 : vector<8x256xf32>
    %cst_51 = arith.constant 0.000000e+00 : f32
    %118 = vector.broadcast %cst_51 : f32 to vector<8x256xf32>
    %119 = arith.maximumf %117, %118 : vector<8x256xf32>
    %cst_52 = arith.constant dense<0.000000e+00> : vector<8xf32>
    %120 = vector.multi_reduction <add>, %119, %cst_52 [1] : vector<8x256xf32> to vector<8xf32>
    %121 = vector.shape_cast %120 : vector<8xf32> to vector<8x1xf32>
    %cst_53 = arith.constant 3.906250e-03 : f32
    %122 = vector.broadcast %cst_53 : f32 to vector<8x1xf32>
    %123 = arith.mulf %121, %122 : vector<8x1xf32>
    %c0_54 = arith.constant 0 : index
    %c0_55 = arith.constant 0 : index
    %124 = vector.load %arg5[%c0_54, %c0_55] : memref<8x8xf32, #tpu.memory_space<vmem>>, vector<8x8xf32>
    %cst_56 = arith.constant dense<0.000000e+00> : vector<8x1xf32>
    %125 = tpu.matmul %124, %123, %cst_56 {dimension_numbers = #tpu.dot_dimension_numbers<[1], [0], [0], [1], [0, 0, 1, 1], [], []>} : vector<8x8xf32>, vector<8x1xf32>, vector<8x1xf32> -> vector<8x1xf32>
    %c0_57 = arith.constant 0 : index
    %c0_58 = arith.constant 0 : index
    %126 = vector.load %arg6[%c0_57, %c0_58] : memref<8x1xf32, #tpu.memory_space<vmem>>, vector<8x1xf32>
    %127 = arith.mulf %125, %126 : vector<8x1xf32>
    %c0_59 = arith.constant 0 : index
    %c0_60 = arith.constant 0 : index
    %128 = vector.load %arg7[%c0_59, %c0_60] : memref<8x1xf32, #tpu.memory_space<vmem>>, vector<8x1xf32>
    %129 = arith.addf %127, %128 : vector<8x1xf32>
    %130 = arith.negf %129 : vector<8x1xf32>
    %131 = math.exp %130 : vector<8x1xf32>
    %cst_61 = arith.constant 1.000000e+00 : f32
    %132 = vector.broadcast %cst_61 : f32 to vector<8x1xf32>
    %133 = arith.addf %132, %131 : vector<8x1xf32>
    %134 = arith.divf %132, %133 : vector<8x1xf32>
    %135 = vector.broadcast %134 : vector<8x1xf32> to vector<8x256xf32>
    %136 = arith.mulf %119, %135 : vector<8x256xf32>
    %c0_62 = arith.constant 0 : index
    %c0_63 = arith.constant 0 : index
    %c0_64 = arith.constant 0 : index
    %137 = vector.load %arg8[%c0_62, %c0_63, %c0_64] : memref<1x8x256xf32, #tpu.memory_space<vmem>>, vector<1x8x256xf32>
    %138 = vector.shape_cast %137 : vector<1x8x256xf32> to vector<8x256xf32>
    %139 = vector.shape_cast %136 : vector<8x256xf32> to vector<1x8x256xf32>
    tpu.vector_store %arg8[%c0_62, %c0_63, %c0_64], %139 {strides = array<i32>} : memref<1x8x256xf32, #tpu.memory_space<vmem>>, vector<1x8x256xf32>,
    return
  }
  func.func @transform_0(%arg0: i32) -> (i32, i32, i32) {
    %c0_i32 = arith.constant 0 : i32
    %c0_i32_0 = arith.constant 0 : i32
    %c0_i32_1 = arith.constant 0 : i32
    return %arg0, %c0_i32, %c0_i32_0 : i32, i32, i32
  }
  func.func @transform_1(%arg0: i32) -> (i32, i32, i32) {
    %c0_i32 = arith.constant 0 : i32
    %c0_i32_0 = arith.constant 0 : i32
    %c0_i32_1 = arith.constant 0 : i32
    %c0_i32_2 = arith.constant 0 : i32
    return %c0_i32, %c0_i32_0, %c0_i32_1 : i32, i32, i32
  }
  func.func @transform_2(%arg0: i32) -> (i32, i32) {
    %c0_i32 = arith.constant 0 : i32
    %c0_i32_0 = arith.constant 0 : i32
    %c0_i32_1 = arith.constant 0 : i32
    return %c0_i32, %c0_i32_0 : i32, i32
  }
  func.func @transform_3(%arg0: i32) -> (i32, i32) {
    %c0_i32 = arith.constant 0 : i32
    %c0_i32_0 = arith.constant 0 : i32
    %c0_i32_1 = arith.constant 0 : i32
    return %c0_i32, %c0_i32_0 : i32, i32
  }
  func.func @transform_4(%arg0: i32) -> (i32, i32) {
    %c0_i32 = arith.constant 0 : i32
    %c0_i32_0 = arith.constant 0 : i32
    %c0_i32_1 = arith.constant 0 : i32
    return %c0_i32, %c0_i32_0 : i32, i32
  }
  func.func @transform_5(%arg0: i32) -> (i32, i32) {
    %c0_i32 = arith.constant 0 : i32
    %c0_i32_0 = arith.constant 0 : i32
    %c0_i32_1 = arith.constant 0 : i32
    return %c0_i32, %c0_i32_0 : i32, i32
  }
  func.func @transform_6(%arg0: i32) -> (i32, i32) {
    %c0_i32 = arith.constant 0 : i32
    %c0_i32_0 = arith.constant 0 : i32
    %c0_i32_1 = arith.constant 0 : i32
    return %c0_i32, %c0_i32_0 : i32, i32
  }
  func.func @transform_7(%arg0: i32) -> (i32, i32, i32) {
    %c0_i32 = arith.constant 0 : i32
    %c0_i32_0 = arith.constant 0 : i32
    %c0_i32_1 = arith.constant 0 : i32
    return %arg0, %c0_i32, %c0_i32_0 : i32, i32, i32
  }
}

</mosaic_0001>

<llo_original>
// kernel: tpu_custom_call.1
$region0: #{tpu_custom_call.1}
  #allocation0 [shape = 'u32[]', space=smem, size = 0x4, offset = 0x4, fixed_abs, tag = 'smem constant byte address 0x4 - core index']
  #allocation1 [shape = 'u32[144,128]{1,0:T(1,128)}', space=vmem, size = 0x12000, scoped, tag = 'internal scratch']
  %s0 = inlined_call_operand.vmem [shape: f32[2,4,256], index: 0, kind: input, shape index: {}]
  %s1 = inlined_call_operand.vmem [shape: f32[9,8,4], index: 1, kind: input, shape index: {}]
  %s2 = inlined_call_operand.vmem [shape: f32[8,1], index: 2, kind: input, shape index: {}]
  %s3 = inlined_call_operand.vmem [shape: f32[8,1], index: 3, kind: input, shape index: {}]
  %s4 = inlined_call_operand.vmem [shape: f32[8,8], index: 4, kind: input, shape index: {}]
  %s5 = inlined_call_operand.vmem [shape: f32[8,1], index: 5, kind: input, shape index: {}]
  %s6 = inlined_call_operand.vmem [shape: f32[8,1], index: 6, kind: input, shape index: {}]
  %s7 = inlined_call_operand.hbm [shape: f32[2,8,256], index: 7, kind: output, shape index: {}]
  %s8 = sld [smem:[#allocation0]]
  $region61: #{tpu_custom_call.1} parent=0
    _
  %s10 = ssub.s32 1, %s8
  %s11 = scalar_select 0, %s10, %s8
  $region1: #{tpu_custom_call.1} parent=0
    #allocation2 [shape = 'u8[16384]{0}', space=vmem, size = 0x4000, scoped, tag = 'output window, operand 0']
    #allocation3 [shape = 's32[2]{0}', space=sflag, size = 0x8, scoped, tag = 'scoped memory for tpu_custom_call.1']
    %12 = vsyncpa [#allocation3], 0
    %s13 = scalar_lea.sflag [#allocation3], 1
    %14 = vsyncpa %s13, 0
    loop: start=0, step=1, limit=4
    $region2: #{tpu_custom_call.1} parent=1 // loop_pre_header
      _
    $region3: #{tpu_custom_call.1} parent=1 // loop_header
      %s16 = sphi 0, %s20
      %p17 = scmp.ge.s32.totalorder %s16, 4
      %s26 = sphi 0, %s28
      %s29 = sphi 0, %s26
      %s30 = sphi 0, %s29
      %s46 = sphi 0, %s30
      %s50 = sphi 0, %s50
      %s52 = sphi 0, %s50
      %s53 = sphi 0, %s52
      %s67 = sphi 0, %s53
      %s71 = sphi 0, %s71
      %s73 = sphi 0, %s71
      %s74 = sphi 0, %s73
      %s88 = sphi 0, %s74
      %s92 = sphi 0, %s92
      %s94 = sphi 0, %s92
      %s95 = sphi 0, %s94
      %s109 = sphi 0, %s95
      %s113 = sphi 0, %s113
      %s115 = sphi 0, %s113
      %s116 = sphi 0, %s115
      %s130 = sphi 0, %s116
      %s134 = sphi 0, %s134
      %s136 = sphi 0, %s134
      %s137 = sphi 0, %s136
      %s151 = sphi 0, %s137
      %s155 = sphi 0, %s155
      %s157 = sphi 0, %s155
      %s158 = sphi 0, %s157
      %s172 = sphi 0, %s158
      %s178 = sphi 0, %s180
      %s181 = sphi 0, %s178
      %s182 = sphi 0, %s181
      %s198 = sphi 0, %s182
    $region4: #{tpu_custom_call.1} parent=1 // loop_header_branch
      %19 = sbr.rel (%p17) target = $region8
    $region5: #{tpu_custom_call.1} parent=1 // loop_body
      %s21 = ssub.s32 %s16, 1
      %s22 = ssub.s32 %s16, 2
      %s23 = sadd.s32 %s16, 1
      %s24 = ssub.s32 %s16, %s23
      %p25 = scmp.eq.s32.totalorder %s24, 0
      %s27 = sadd.s32 %s26, 1
      %s28 = scalar_select %p25, %s26, %s27
      %p31 = pneg %p25
      %p32 = scmp.eq.s32.totalorder %s16, 1
      %p33 = por %p31, %p32
      %p34 = scmp.ne.s32.totalorder %s26, %s29
      %p35 = scmp.eq.s32.totalorder %s16, 0
      %p36 = por %p34, %p35
      %p37 = scmp.ne.s32.totalorder %s26, %s29
      %p38 = scmp.eq.s32.totalorder %s21, 1
      %p39 = por %p37, %p38
      %p40 = scmp.ne.s32.totalorder %s29, %s30
      %p41 = scmp.eq.s32.totalorder %s21, 0
      %p42 = por %p40, %p41
      %p43 = scmp.ne.s32.totalorder %s29, %s30
      %p44 = scmp.eq.s32.totalorder %s22, 1
      %p45 = por %p43, %p44
      %p47 = scmp.ne.s32.totalorder %s30, %s46
      %p48 = scmp.eq.s32.totalorder %s22, 0
      %p49 = por %p47, %p48
      %s51 = sadd.s32 %s50, 1
      %p54 = scmp.eq.s32.totalorder %s16, 1
      %p55 = scmp.ne.s32.totalorder %s50, %s52
      %p56 = scmp.eq.s32.totalorder %s16, 0
      %p57 = por %p55, %p56
      %p58 = scmp.ne.s32.totalorder %s50, %s52
      %p59 = scmp.eq.s32.totalorder %s21, 1
      %p60 = por %p58, %p59
      %p61 = scmp.ne.s32.totalorder %s52, %s53
      %p62 = scmp.eq.s32.totalorder %s21, 0
      %p63 = por %p61, %p62
      %p64 = scmp.ne.s32.totalorder %s52, %s53
      %p65 = scmp.eq.s32.totalorder %s22, 1
      %p66 = por %p64, %p65
      %p68 = scmp.ne.s32.totalorder %s53, %s67
      %p69 = scmp.eq.s32.totalorder %s22, 0
      %p70 = por %p68, %p69
      %s72 = sadd.s32 %s71, 1
      %p75 = scmp.eq.s32.totalorder %s16, 1
      %p76 = scmp.ne.s32.totalorder %s71, %s73
      %p77 = scmp.eq.s32.totalorder %s16, 0
      %p78 = por %p76, %p77
      %p79 = scmp.ne.s32.totalorder %s71, %s73
      %p80 = scmp.eq.s32.totalorder %s21, 1
      %p81 = por %p79, %p80
      %p82 = scmp.ne.s32.totalorder %s73, %s74
      %p83 = scmp.eq.s32.totalorder %s21, 0
      %p84 = por %p82, %p83
      %p85 = scmp.ne.s32.totalorder %s73, %s74
      %p86 = scmp.eq.s32.totalorder %s22, 1
      %p87 = por %p85, %p86
      %p89 = scmp.ne.s32.totalorder %s74, %s88
      %p90 = scmp.eq.s32.totalorder %s22, 0
      %p91 = por %p89, %p90
      %s93 = sadd.s32 %s92, 1
      %p96 = scmp.eq.s32.totalorder %s16, 1
      %p97 = scmp.ne.s32.totalorder %s92, %s94
      %p98 = scmp.eq.s32.totalorder %s16, 0
      %p99 = por %p97, %p98
      %p100 = scmp.ne.s32.totalorder %s92, %s94
      %p101 = scmp.eq.s32.totalorder %s21, 1
      %p102 = por %p100, %p101
      %p103 = scmp.ne.s32.totalorder %s94, %s95
      %p104 = scmp.eq.s32.totalorder %s21, 0
      %p105 = por %p103, %p104
      %p106 = scmp.ne.s32.totalorder %s94, %s95
      %p107 = scmp.eq.s32.totalorder %s22, 1
      %p108 = por %p106, %p107
      %p110 = scmp.ne.s32.totalorder %s95, %s109
      %p111 = scmp.eq.s32.totalorder %s22, 0
      %p112 = por %p110, %p111
      %s114 = sadd.s32 %s113, 1
      %p117 = scmp.eq.s32.totalorder %s16, 1
      %p118 = scmp.ne.s32.totalorder %s113, %s115
      %p119 = scmp.eq.s32.totalorder %s16, 0
      %p120 = por %p118, %p119
      %p121 = scmp.ne.s32.totalorder %s113, %s115
      %p122 = scmp.eq.s32.totalorder %s21, 1
      %p123 = por %p121, %p122
      %p124 = scmp.ne.s32.totalorder %s115, %s116
      %p125 = scmp.eq.s32.totalorder %s21, 0
      %p126 = por %p124, %p125
      %p127 = scmp.ne.s32.totalorder %s115, %s116
      %p128 = scmp.eq.s32.totalorder %s22, 1
      %p129 = por %p127, %p128
      %p131 = scmp.ne.s32.totalorder %s116, %s130
      %p132 = scmp.eq.s32.totalorder %s22, 0
      %p133 = por %p131, %p132
      %s135 = sadd.s32 %s134, 1
      %p138 = scmp.eq.s32.totalorder %s16, 1
      %p139 = scmp.ne.s32.totalorder %s134, %s136
      %p140 = scmp.eq.s32.totalorder %s16, 0
      %p141 = por %p139, %p140
      %p142 = scmp.ne.s32.totalorder %s134, %s136
      %p143 = scmp.eq.s32.totalorder %s21, 1
      %p144 = por %p142, %p143
      %p145 = scmp.ne.s32.totalorder %s136, %s137
      %p146 = scmp.eq.s32.totalorder %s21, 0
      %p147 = por %p145, %p146
      %p148 = scmp.ne.s32.totalorder %s136, %s137
      %p149 = scmp.eq.s32.totalorder %s22, 1
      %p150 = por %p148, %p149
      %p152 = scmp.ne.s32.totalorder %s137, %s151
      %p153 = scmp.eq.s32.totalorder %s22, 0
      %p154 = por %p152, %p153
      %s156 = sadd.s32 %s155, 1
      %p159 = scmp.eq.s32.totalorder %s16, 1
      %p160 = scmp.ne.s32.totalorder %s155, %s157
      %p161 = scmp.eq.s32.totalorder %s16, 0
      %p162 = por %p160, %p161
      %p163 = scmp.ne.s32.totalorder %s155, %s157
      %p164 = scmp.eq.s32.totalorder %s21, 1
      %p165 = por %p163, %p164
      %p166 = scmp.ne.s32.totalorder %s157, %s158
      %p167 = scmp.eq.s32.totalorder %s21, 0
      %p168 = por %p166, %p167
      %p169 = scmp.ne.s32.totalorder %s157, %s158
      %p170 = scmp.eq.s32.totalorder %s22, 1
      %p171 = por %p169, %p170
      %p173 = scmp.ne.s32.totalorder %s158, %s172
      %p174 = scmp.eq.s32.totalorder %s22, 0
      %p175 = por %p173, %p174
      %s176 = ssub.s32 %s16, %s23
      %p177 = scmp.eq.s32.totalorder %s176, 0
      %s179 = sadd.s32 %s178, 1
      %s180 = scalar_select %p177, %s178, %s179
      %p183 = pneg %p177
      %p184 = scmp.eq.s32.totalorder %s16, 1
      %p185 = por %p183, %p184
      %p186 = scmp.ne.s32.totalorder %s178, %s181
      %p187 = scmp.eq.s32.totalorder %s16, 0
      %p188 = por %p186, %p187
      %p189 = scmp.ne.s32.totalorder %s178, %s181
      %p190 = scmp.eq.s32.totalorder %s21, 1
      %p191 = por %p189, %p190
      %p192 = scmp.ne.s32.totalorder %s181, %s182
      %p193 = scmp.eq.s32.totalorder %s21, 0
      %p194 = por %p192, %p193
      %p195 = scmp.ne.s32.totalorder %s181, %s182
      %p196 = scmp.eq.s32.totalorder %s22, 1
      %p197 = por %p195, %p196
      %p199 = scmp.ne.s32.totalorder %s182, %s198
      %p200 = scmp.eq.s32.totalorder %s22, 0
      %p201 = por %p199, %p200
      %p202 = scmp.le.s32.totalorder 1, %s16
      %p203 = scmp.lt.s32.totalorder %s16, 3
      %p204 = pnand %p202, %p203
      %p205 = pneg %p204
      // Predicated region
      $region9: #{tpu_custom_call.1} parent=5 // pred_check
        _
      $region10: #{tpu_custom_call.1} parent=5 // pred_check_branch
        %207 = sbr.rel (%p204) target = $region12
      $region11: #{tpu_custom_call.1} parent=5 // pred_region
        %s208 = ssub.s32 %s16, 1
        // Predicated region
        $region13: #{tpu_custom_call.1} parent=11 // pred_check
          %p209 = pneg %p63
        $region14: #{tpu_custom_call.1} parent=11 // pred_check_branch
          %211 = sbr.rel (%p209) target = $region16
        $region15: #{tpu_custom_call.1} parent=11 // pred_region
          _
        $region16: #{tpu_custom_call.1} parent=11 // pred_fallthru
          _
        // Predicated region
        $region17: #{tpu_custom_call.1} parent=11 // pred_check
          %p212 = pneg %p84
        $region18: #{tpu_custom_call.1} parent=11 // pred_check_branch
          %214 = sbr.rel (%p212) target = $region20
        $region19: #{tpu_custom_call.1} parent=11 // pred_region
          _
        $region20: #{tpu_custom_call.1} parent=11 // pred_fallthru
          _
        // Predicated region
        $region21: #{tpu_custom_call.1} parent=11 // pred_check
          %p215 = pneg %p105
        $region22: #{tpu_custom_call.1} parent=11 // pred_check_branch
          %217 = sbr.rel (%p215) target = $region24
        $region23: #{tpu_custom_call.1} parent=11 // pred_region
          _
        $region24: #{tpu_custom_call.1} parent=11 // pred_fallthru
          _
        // Predicated region
        $region25: #{tpu_custom_call.1} parent=11 // pred_check
          %p218 = pneg %p126
        $region26: #{tpu_custom_call.1} parent=11 // pred_check_branch
          %220 = sbr.rel (%p218) target = $region28
        $region27: #{tpu_custom_call.1} parent=11 // pred_region
          _
        $region28: #{tpu_custom_call.1} parent=11 // pred_fallthru
          _
        // Predicated region
        $region29: #{tpu_custom_call.1} parent=11 // pred_check
          %p221 = pneg %p147
        $region30: #{tpu_custom_call.1} parent=11 // pred_check_branch
          %223 = sbr.rel (%p221) target = $region32
        $region31: #{tpu_custom_call.1} parent=11 // pred_region
          _
        $region32: #{tpu_custom_call.1} parent=11 // pred_fallthru
          _
        // Predicated region
        $region33: #{tpu_custom_call.1} parent=11 // pred_check
          %p224 = pneg %p168
        $region34: #{tpu_custom_call.1} parent=11 // pred_check_branch
          %226 = sbr.rel (%p224) target = $region36
        $region35: #{tpu_custom_call.1} parent=11 // pred_region
          _
        $region36: #{tpu_custom_call.1} parent=11 // pred_fallthru
          _
      $region12: #{tpu_custom_call.1} parent=5 // pred_fallthru
        _
      %p227 = scmp.lt.s32.totalorder %s16, 2
      // Predicated region
      $region37: #{tpu_custom_call.1} parent=5 // pred_check
        %p228 = pneg %p227
      $region38: #{tpu_custom_call.1} parent=5 // pred_check_branch
        %230 = sbr.rel (%p228) target = $region40
      $region39: #{tpu_custom_call.1} parent=5 // pred_region
        // Predicated region
        $region41: #{tpu_custom_call.1} parent=39 // pred_check
          %p231 = pneg %p36
        $region42: #{tpu_custom_call.1} parent=39 // pred_check_branch
          %233 = sbr.rel (%p231) target = $region44
        $region43: #{tpu_custom_call.1} parent=39 // pred_region
          %p234 = scmp.lt.s32.totalorder %s16, 1
          %s235 = scalar_select %p234, %s16, 1
          %s236 = smul.addr %s235, 2
          %s237 = smul.addr %s236, 4
          %s238 = scalar_lea.vmem %s0, %s237
        $region44: #{tpu_custom_call.1} parent=39 // pred_fallthru
          _
      $region40: #{tpu_custom_call.1} parent=5 // pred_fallthru
        _
      %p239 = scmp.le.s32.totalorder 1, %s16
      %p240 = scmp.lt.s32.totalorder %s16, 3
      %p241 = pnand %p239, %p240
      %p242 = pneg %p241
      // Predicated region
      $region45: #{tpu_custom_call.1} parent=5 // pred_check
        _
      $region46: #{tpu_custom_call.1} parent=5 // pred_check_branch
        %244 = sbr.rel (%p241) target = $region48
      $region47: #{tpu_custom_call.1} parent=5 // pred_region
        %s245 = ssub.s32 %s16, 1
        %p246 = scmp.lt.s32.totalorder %s21, 1
        %s247 = scalar_select %p246, %s21, 1
        %s248 = smul.addr %s247, 2
        %s249 = smul.addr %s248, 4
        %s250 = scalar_lea.vmem %s0, %s249
        %p251 = pneg %p42
        %p252 = pneg %p39
        %p253 = pneg %p63
        %p254 = pneg %p60
        %p255 = pneg %p84
        %p256 = pneg %p81
        %p257 = pneg %p105
        %p258 = pneg %p102
        %p259 = pneg %p126
        %p260 = pneg %p123
        %p261 = pneg %p147
        %p262 = pneg %p144
        %p263 = pneg %p168
        %p264 = pneg %p165
        %p265 = pneg %p194
        %p266 = pneg %p191
        %s267 = sand.u32 %s181, 1
        %s268 = scalar_lea.sflag [#allocation3], %s267
        %s269 = sand.u32 %s181, 1
        %s270 = smul.addr %s269, 16
        %s271 = scalar_lea.vmem [#allocation2], %s270
        %p272 = scmp.lt.s32.totalorder %s21, 1
        %s273 = scalar_select %p272, %s21, 1
        %s274 = smul.addr %s273, 2
        %s275 = smul.addr %s274, 4
        %s276 = scalar_lea.vmem %s0, %s275
        %v277 = vld [vmem:[%s276] sm:$0xff]
        %v278 = vlaneseq
        %v279 = vand.u32 %v278, 127
        %v280 = vadd.s32 %v279, 128
        %vm281 = vcmp.lt.s32.totalorder %v279, 0
        %v282 = vsub.s32 0, %v279
        %v283 = vsel %vm281, %v282, %v279
        %v284 = vshrl.u32 %v283, 4
        %v285 = vand.u32 %v283, 15
        %v286 = vsub.s32 0, %v285
        %v287 = vsel %vm281, %v286, %v285
        %vm288 = vcmp.lt.s32.totalorder %v280, 0
        %v289 = vsub.s32 0, %v280
        %v290 = vsel %vm288, %v289, %v280
        %v291 = vshrl.u32 %v290, 4
        %v292 = vand.u32 %v290, 15
        %v293 = vsub.s32 0, %v292
        %v294 = vsel %vm288, %v293, %v292
        %vm295 = vcmp.ne.s32.totalorder %v287, 0
        %vm296 = vcmp.ne.s32.totalorder %v294, 0
        %vm297 = vcmp.lt.s32.totalorder %v287, 0
        %vm298 = vcmp.lt.s32.totalorder %v294, 0
        %vm299 = vmand %vm297, %vm295
        %vm300 = vmand %vm298, %vm296
        %v301 = vadd.s32 %v287, 16
        %v302 = vadd.s32 %v294, 16
        %v303 = vsel %vm299, %v301, %v287
        %v304 = vsel %vm300, %v302, %v294
        %vm305 = vcmp.ge.s32.totalorder %v303, 1
        %vm306 = vcmp.ge.s32.totalorder %v304, 1
        %vm307 = vcmp.le.s32.totalorder %v303, 14
        %vm308 = vcmp.le.s32.totalorder %v304, 14
        %v310 = vcombine.high %v277, %v277
        %311 = vrot.lane.b32.xlu0 %v277, 17
        %v312 = vpop.permute.xlu0 %311
        %313 = vrot.lane.b32.xlu0 %v310, 17
        %v314 = vpop.permute.xlu0 %313
        %vm315 = vcmask 138240
        %v316 = vsel %vm315, %v312, %v314
        %v319 = vsel %vm315, 0.0, %v312
        %v320 = vsel %vm305, 1, 0
        %v321 = vsel %vm306, 1, 0
        %vm322 = vcmp.eq.s32.totalorder %v320, 1
        %vm323 = vcmp.eq.s32.totalorder %v321, 1
        %v324 = vsel %vm322, %v319, 0.0
        %v325 = vsel %vm323, %v316, 0.0
        %v326 = vld [vmem:[%s1] sm:$0xff]
        %327 = vrot.lane.b32.xlu0 %v277, 16
        %v328 = vpop.permute.xlu0 %327
        %329 = vrot.lane.b32.xlu0 %v310, 16
        %v330 = vpop.permute.xlu0 %329
        %vm331 = vcmask 130048
        %v332 = vsel %vm331, %v328, %v330
        %v334 = vsel %vm331, 0.0, %v328
        %s335 = scalar_lea.vmem %s1, 8
        %v336 = vld [vmem:[%s335] sm:$0xff]
        %vm337 = vcmask 31744
        %v339 = vsel %vm337, %v336, 0
        %vm341 = vcmask 1043456
        %v343 = vsel %vm341, %v334, 0
        %v345 = vsel %vm341, %v332, 0
        %347 = vmatprep.subr.mxu0 0.0
        %348 = vmatpush1.msra.mxu0 0.0
        %349 = vmatprep.subr.mxu0 0.0
        %350 = vmatpush1.msra.mxu0 0.0
        %351 = vmatprep.subr.mxu0 0.0
        %352 = vmatpush1.msra.mxu0 0.0
        %353 = vmatprep.subr.mxu0 0.0
        %354 = vmatpush1.msra.mxu0 0.0
        %355 = vmatprep.subr.mxu0 0.0
        %356 = vmatpush1.msra.mxu0 0.0
        %357 = vmatprep.subr.mxu0 0.0
        %358 = vmatpush1.msra.mxu0 0.0
        %359 = vmatprep.subr.mxu0 0.0
        %360 = vmatpush1.msra.mxu0 0.0
        %361 = vmatprep.subr.mxu0 0.0
        %362 = vmatpush1.msra.mxu0 0.0
        %363 = vmatprep.subr.mxu0 0.0
        %364 = vmatpush1.msra.mxu0 0.0
        %365 = vmatprep.subr.mxu0 0.0
        %366 = vmatpush1.msra.mxu0 0.0
        %367 = vmatprep.subr.mxu0 0.0
        %368 = vmatpush1.msra.mxu0 0.0
        %369 = vmatprep.subr.mxu0 0.0
        %370 = vmatpush1.msra.mxu0 0.0
        %371 = vmatprep.subr.mxu0 0.0
        %372 = vmatpush1.msra.mxu0 0.0
        %373 = vmatprep.subr.mxu0 0.0
        %374 = vmatpush1.msra.mxu0 0.0
        %375 = vmatprep.subr.mxu0 0.0
        %376 = vmatpush1.msra.mxu0 0.0
        %377 = vmatprep.subr.mxu0 %v345
        %378 = vmatpush1.msra.mxu0 %v343
        %379 = vmatprep.subr.mxu0 0.0
        %380 = vmatpush2.msra.mxu0 0.0
        %381 = vmatprep.subr.mxu0 0.0
        %382 = vmatpush2.msra.mxu0 0.0
        %383 = vmatprep.subr.mxu0 0.0
        %384 = vmatpush2.msra.mxu0 0.0
        %385 = vmatprep.subr.mxu0 0.0
        %386 = vmatpush2.msra.mxu0 0.0
        %387 = vmatprep.subr.mxu0 0.0
        %388 = vmatpush2.msra.mxu0 0.0
        %389 = vmatprep.subr.mxu0 0.0
        %390 = vmatpush2.msra.mxu0 0.0
        %391 = vmatprep.subr.mxu0 0.0
        %392 = vmatpush2.msra.mxu0 0.0
        %393 = vmatprep.subr.mxu0 0.0
        %394 = vmatpush2.msra.mxu0 0.0
        %395 = vmatprep.subr.mxu0 0.0
        %396 = vmatpush2.msra.mxu0 0.0
        %397 = vmatprep.subr.mxu0 0.0
        %398 = vmatpush2.msra.mxu0 0.0
        %399 = vmatprep.subr.mxu0 0.0
        %400 = vmatpush2.msra.mxu0 0.0
        %401 = vmatprep.subr.mxu0 0.0
        %402 = vmatpush2.msra.mxu0 0.0
        %403 = vmatprep.subr.mxu0 0.0
        %404 = vmatpush2.msra.mxu0 0.0
        %405 = vmatprep.subr.mxu0 0.0
        %406 = vmatpush2.msra.mxu0 0.0
        %407 = vmatprep.subr.mxu0 0.0
        %408 = vmatpush2.msra.mxu0 0.0
        %409 = vmatprep.subr.mxu0 0.0
        %410 = vmatpush2.msra.mxu0 0.0
        %411 = vmatprep.mubr.f32.mxu0 0.0
        %412 = vmatmul.mubr.f32.gmra.mxu0 %v339
        %v413 = vpop.f32.mrf.mxu0
        %v414 = vadd.f32 0.0, %v413
        %v415 = vpop.f32.mrf.mxu0
        %v416 = vadd.f32 0.0, %v415
        %417 = vdwg.mxu0
        %v419 = vsel %vm337, %v326, 0
        %v422 = vsel %vm341, %v324, 0
        %v425 = vsel %vm341, %v325, 0
        %427 = vmatprep.subr.mxu0 0.0
        %428 = vmatpush1.msra.mxu0 0.0
        %429 = vmatprep.subr.mxu0 0.0
        %430 = vmatpush1.msra.mxu0 0.0
        %431 = vmatprep.subr.mxu0 0.0
        %432 = vmatpush1.msra.mxu0 0.0
        %433 = vmatprep.subr.mxu0 0.0
        %434 = vmatpush1.msra.mxu0 0.0
        %435 = vmatprep.subr.mxu0 0.0
        %436 = vmatpush1.msra.mxu0 0.0
        %437 = vmatprep.subr.mxu0 0.0
        %438 = vmatpush1.msra.mxu0 0.0
        %439 = vmatprep.subr.mxu0 0.0
        %440 = vmatpush1.msra.mxu0 0.0
        %441 = vmatprep.subr.mxu0 0.0
        %442 = vmatpush1.msra.mxu0 0.0
        %443 = vmatprep.subr.mxu0 0.0
        %444 = vmatpush1.msra.mxu0 0.0
        %445 = vmatprep.subr.mxu0 0.0
        %446 = vmatpush1.msra.mxu0 0.0
        %447 = vmatprep.subr.mxu0 0.0
        %448 = vmatpush1.msra.mxu0 0.0
        %449 = vmatprep.subr.mxu0 0.0
        %450 = vmatpush1.msra.mxu0 0.0
        %451 = vmatprep.subr.mxu0 0.0
        %452 = vmatpush1.msra.mxu0 0.0
        %453 = vmatprep.subr.mxu0 0.0
        %454 = vmatpush1.msra.mxu0 0.0
        %455 = vmatprep.subr.mxu0 0.0
        %456 = vmatpush1.msra.mxu0 0.0
        %457 = vmatprep.subr.mxu0 %v425
        %458 = vmatpush1.msra.mxu0 %v422
        %459 = vmatprep.subr.mxu0 0.0
        %460 = vmatpush2.msra.mxu0 0.0
        %461 = vmatprep.subr.mxu0 0.0
        %462 = vmatpush2.msra.mxu0 0.0
        %463 = vmatprep.subr.mxu0 0.0
        %464 = vmatpush2.msra.mxu0 0.0
        %465 = vmatprep.subr.mxu0 0.0
        %466 = vmatpush2.msra.mxu0 0.0
        %467 = vmatprep.subr.mxu0 0.0
        %468 = vmatpush2.msra.mxu0 0.0
        %469 = vmatprep.subr.mxu0 0.0
        %470 = vmatpush2.msra.mxu0 0.0
        %471 = vmatprep.subr.mxu0 0.0
        %472 = vmatpush2.msra.mxu0 0.0
        %473 = vmatprep.subr.mxu0 0.0
        %474 = vmatpush2.msra.mxu0 0.0
        %475 = vmatprep.subr.mxu0 0.0
        %476 = vmatpush2.msra.mxu0 0.0
        %477 = vmatprep.subr.mxu0 0.0
        %478 = vmatpush2.msra.mxu0 0.0
        %479 = vmatprep.subr.mxu0 0.0
        %480 = vmatpush2.msra.mxu0 0.0
        %481 = vmatprep.subr.mxu0 0.0
        %482 = vmatpush2.msra.mxu0 0.0
        %483 = vmatprep.subr.mxu0 0.0
        %484 = vmatpush2.msra.mxu0 0.0
        %485 = vmatprep.subr.mxu0 0.0
        %486 = vmatpush2.msra.mxu0 0.0
        %487 = vmatprep.subr.mxu0 0.0
        %488 = vmatpush2.msra.mxu0 0.0
        %489 = vmatprep.subr.mxu0 0.0
        %490 = vmatpush2.msra.mxu0 0.0
        %491 = vmatprep.mubr.f32.mxu0 0.0
        %492 = vmatmul.mubr.f32.gmra.mxu0 %v419
        %v493 = vpop.f32.mrf.mxu0
        %v494 = vadd.f32 %v414, %v493
        %v495 = vpop.f32.mrf.mxu0
        %v496 = vadd.f32 %v416, %v495
        %497 = vdwg.mxu0
        %498 = vrot.lane.b32.xlu0 %v277, 15
        %v499 = vpop.permute.xlu0 %498
        %500 = vrot.lane.b32.xlu0 %v310, 15
        %v501 = vpop.permute.xlu0 %500
        %vm502 = vcmask 121856
        %v503 = vsel %vm502, %v499, %v501
        %v506 = vsel %vm502, 0.0, %v499
        %v507 = vsel %vm307, 1, 0
        %v508 = vsel %vm308, 1, 0
        %vm509 = vcmp.eq.s32.totalorder %v507, 1
        %vm510 = vcmp.eq.s32.totalorder %v508, 1
        %v511 = vsel %vm509, %v506, 0.0
        %v512 = vsel %vm510, %v503, 0.0
        %s513 = scalar_lea.vmem %s1, 16
        %v514 = vld [vmem:[%s513] sm:$0xff]
        %v516 = vsel %vm337, %v514, 0
        %v519 = vsel %vm341, %v511, 0
        %v522 = vsel %vm341, %v512, 0
        %524 = vmatprep.subr.mxu0 0.0
        %525 = vmatpush1.msra.mxu0 0.0
        %526 = vmatprep.subr.mxu0 0.0
        %527 = vmatpush1.msra.mxu0 0.0
        %528 = vmatprep.subr.mxu0 0.0
        %529 = vmatpush1.msra.mxu0 0.0
        %530 = vmatprep.subr.mxu0 0.0
        %531 = vmatpush1.msra.mxu0 0.0
        %532 = vmatprep.subr.mxu0 0.0
        %533 = vmatpush1.msra.mxu0 0.0
        %534 = vmatprep.subr.mxu0 0.0
        %535 = vmatpush1.msra.mxu0 0.0
        %536 = vmatprep.subr.mxu0 0.0
        %537 = vmatpush1.msra.mxu0 0.0
        %538 = vmatprep.subr.mxu0 0.0
        %539 = vmatpush1.msra.mxu0 0.0
        %540 = vmatprep.subr.mxu0 0.0
        %541 = vmatpush1.msra.mxu0 0.0
        %542 = vmatprep.subr.mxu0 0.0
        %543 = vmatpush1.msra.mxu0 0.0
        %544 = vmatprep.subr.mxu0 0.0
        %545 = vmatpush1.msra.mxu0 0.0
        %546 = vmatprep.subr.mxu0 0.0
        %547 = vmatpush1.msra.mxu0 0.0
        %548 = vmatprep.subr.mxu0 0.0
        %549 = vmatpush1.msra.mxu0 0.0
        %550 = vmatprep.subr.mxu0 0.0
        %551 = vmatpush1.msra.mxu0 0.0
        %552 = vmatprep.subr.mxu0 0.0
        %553 = vmatpush1.msra.mxu0 0.0
        %554 = vmatprep.subr.mxu0 %v522
        %555 = vmatpush1.msra.mxu0 %v519
        %556 = vmatprep.subr.mxu0 0.0
        %557 = vmatpush2.msra.mxu0 0.0
        %558 = vmatprep.subr.mxu0 0.0
        %559 = vmatpush2.msra.mxu0 0.0
        %560 = vmatprep.subr.mxu0 0.0
        %561 = vmatpush2.msra.mxu0 0.0
        %562 = vmatprep.subr.mxu0 0.0
        %563 = vmatpush2.msra.mxu0 0.0
        %564 = vmatprep.subr.mxu0 0.0
        %565 = vmatpush2.msra.mxu0 0.0
        %566 = vmatprep.subr.mxu0 0.0
        %567 = vmatpush2.msra.mxu0 0.0
        %568 = vmatprep.subr.mxu0 0.0
        %569 = vmatpush2.msra.mxu0 0.0
        %570 = vmatprep.subr.mxu0 0.0
        %571 = vmatpush2.msra.mxu0 0.0
        %572 = vmatprep.subr.mxu0 0.0
        %573 = vmatpush2.msra.mxu0 0.0
        %574 = vmatprep.subr.mxu0 0.0
        %575 = vmatpush2.msra.mxu0 0.0
        %576 = vmatprep.subr.mxu0 0.0
        %577 = vmatpush2.msra.mxu0 0.0
        %578 = vmatprep.subr.mxu0 0.0
        %579 = vmatpush2.msra.mxu0 0.0
        %580 = vmatprep.subr.mxu0 0.0
        %581 = vmatpush2.msra.mxu0 0.0
        %582 = vmatprep.subr.mxu0 0.0
        %583 = vmatpush2.msra.mxu0 0.0
        %584 = vmatprep.subr.mxu0 0.0
        %585 = vmatpush2.msra.mxu0 0.0
        %586 = vmatprep.subr.mxu0 0.0
        %587 = vmatpush2.msra.mxu0 0.0
        %588 = vmatprep.mubr.f32.mxu0 0.0
        %589 = vmatmul.mubr.f32.gmra.mxu0 %v516
        %v590 = vpop.f32.mrf.mxu0
        %v591 = vadd.f32 0.0, %v590
        %v592 = vpop.f32.mrf.mxu0
        %v593 = vadd.f32 0.0, %v592
        %594 = vdwg.mxu0
        %v595 = vadd.f32 %v494, %v591
        %v596 = vadd.f32 %v496, %v593
        %597 = vrot.lane.b32.xlu0 %v277, 1
        %v598 = vpop.permute.xlu0 %597
        %599 = vrot.lane.b32.xlu0 %v310, 1
        %v600 = vpop.permute.xlu0 %599
        %vm601 = vcmask 7168
        %v602 = vsel %vm601, %v598, %v600
        %v605 = vsel %vm601, 0.0, %v598
        %v606 = vsel %vm322, %v605, 0.0
        %v607 = vsel %vm323, %v602, 0.0
        %s608 = scalar_lea.vmem %s1, 24
        %v609 = vld [vmem:[%s608] sm:$0xff]
        %v611 = vsel %vm337, %v609, 0
        %v614 = vsel %vm341, %v606, 0
        %v617 = vsel %vm341, %v607, 0
        %619 = vmatprep.subr.mxu0 0.0
        %620 = vmatpush1.msra.mxu0 0.0
        %621 = vmatprep.subr.mxu0 0.0
        %622 = vmatpush1.msra.mxu0 0.0
        %623 = vmatprep.subr.mxu0 0.0
        %624 = vmatpush1.msra.mxu0 0.0
        %625 = vmatprep.subr.mxu0 0.0
        %626 = vmatpush1.msra.mxu0 0.0
        %627 = vmatprep.subr.mxu0 0.0
        %628 = vmatpush1.msra.mxu0 0.0
        %629 = vmatprep.subr.mxu0 0.0
        %630 = vmatpush1.msra.mxu0 0.0
        %631 = vmatprep.subr.mxu0 0.0
        %632 = vmatpush1.msra.mxu0 0.0
        %633 = vmatprep.subr.mxu0 0.0
        %634 = vmatpush1.msra.mxu0 0.0
        %635 = vmatprep.subr.mxu0 0.0
        %636 = vmatpush1.msra.mxu0 0.0
        %637 = vmatprep.subr.mxu0 0.0
        %638 = vmatpush1.msra.mxu0 0.0
        %639 = vmatprep.subr.mxu0 0.0
        %640 = vmatpush1.msra.mxu0 0.0
        %641 = vmatprep.subr.mxu0 0.0
        %642 = vmatpush1.msra.mxu0 0.0
        %643 = vmatprep.subr.mxu0 0.0
        %644 = vmatpush1.msra.mxu0 0.0
        %645 = vmatprep.subr.mxu0 0.0
        %646 = vmatpush1.msra.mxu0 0.0
        %647 = vmatprep.subr.mxu0 0.0
        %648 = vmatpush1.msra.mxu0 0.0
        %649 = vmatprep.subr.mxu0 %v617
        %650 = vmatpush1.msra.mxu0 %v614
        %651 = vmatprep.subr.mxu0 0.0
        %652 = vmatpush2.msra.mxu0 0.0
        %653 = vmatprep.subr.mxu0 0.0
        %654 = vmatpush2.msra.mxu0 0.0
        %655 = vmatprep.subr.mxu0 0.0
        %656 = vmatpush2.msra.mxu0 0.0
        %657 = vmatprep.subr.mxu0 0.0
        %658 = vmatpush2.msra.mxu0 0.0
        %659 = vmatprep.subr.mxu0 0.0
        %660 = vmatpush2.msra.mxu0 0.0
        %661 = vmatprep.subr.mxu0 0.0
        %662 = vmatpush2.msra.mxu0 0.0
        %663 = vmatprep.subr.mxu0 0.0
        %664 = vmatpush2.msra.mxu0 0.0
        %665 = vmatprep.subr.mxu0 0.0
        %666 = vmatpush2.msra.mxu0 0.0
        %667 = vmatprep.subr.mxu0 0.0
        %668 = vmatpush2.msra.mxu0 0.0
        %669 = vmatprep.subr.mxu0 0.0
        %670 = vmatpush2.msra.mxu0 0.0
        %671 = vmatprep.subr.mxu0 0.0
        %672 = vmatpush2.msra.mxu0 0.0
        %673 = vmatprep.subr.mxu0 0.0
        %674 = vmatpush2.msra.mxu0 0.0
        %675 = vmatprep.subr.mxu0 0.0
        %676 = vmatpush2.msra.mxu0 0.0
        %677 = vmatprep.subr.mxu0 0.0
        %678 = vmatpush2.msra.mxu0 0.0
        %679 = vmatprep.subr.mxu0 0.0
        %680 = vmatpush2.msra.mxu0 0.0
        %681 = vmatprep.subr.mxu0 0.0
        %682 = vmatpush2.msra.mxu0 0.0
        %683 = vmatprep.mubr.f32.mxu0 0.0
        %684 = vmatmul.mubr.f32.gmra.mxu0 %v611
        %v685 = vpop.f32.mrf.mxu0
        %v686 = vadd.f32 0.0, %v685
        %v687 = vpop.f32.mrf.mxu0
        %v688 = vadd.f32 0.0, %v687
        %689 = vdwg.mxu0
        %v690 = vadd.f32 %v595, %v686
        %v691 = vadd.f32 %v596, %v688
        %s692 = scalar_lea.vmem %s1, 32
        %v693 = vld [vmem:[%s692] sm:$0xff]
        %v695 = vsel %vm337, %v693, 0
        %v697 = vsel %vm341, %v277, 0
        %v699 = vsel %vm341, %v310, 0
        %701 = vmatprep.subr.mxu0 0.0
        %702 = vmatpush1.msra.mxu0 0.0
        %703 = vmatprep.subr.mxu0 0.0
        %704 = vmatpush1.msra.mxu0 0.0
        %705 = vmatprep.subr.mxu0 0.0
        %706 = vmatpush1.msra.mxu0 0.0
        %707 = vmatprep.subr.mxu0 0.0
        %708 = vmatpush1.msra.mxu0 0.0
        %709 = vmatprep.subr.mxu0 0.0
        %710 = vmatpush1.msra.mxu0 0.0
        %711 = vmatprep.subr.mxu0 0.0
        %712 = vmatpush1.msra.mxu0 0.0
        %713 = vmatprep.subr.mxu0 0.0
        %714 = vmatpush1.msra.mxu0 0.0
        %715 = vmatprep.subr.mxu0 0.0
        %716 = vmatpush1.msra.mxu0 0.0
        %717 = vmatprep.subr.mxu0 0.0
        %718 = vmatpush1.msra.mxu0 0.0
        %719 = vmatprep.subr.mxu0 0.0
        %720 = vmatpush1.msra.mxu0 0.0
        %721 = vmatprep.subr.mxu0 0.0
        %722 = vmatpush1.msra.mxu0 0.0
        %723 = vmatprep.subr.mxu0 0.0
        %724 = vmatpush1.msra.mxu0 0.0
        %725 = vmatprep.subr.mxu0 0.0
        %726 = vmatpush1.msra.mxu0 0.0
        %727 = vmatprep.subr.mxu0 0.0
        %728 = vmatpush1.msra.mxu0 0.0
        %729 = vmatprep.subr.mxu0 0.0
        %730 = vmatpush1.msra.mxu0 0.0
        %731 = vmatprep.subr.mxu0 %v699
        %732 = vmatpush1.msra.mxu0 %v697
        %733 = vmatprep.subr.mxu0 0.0
        %734 = vmatpush2.msra.mxu0 0.0
        %735 = vmatprep.subr.mxu0 0.0
        %736 = vmatpush2.msra.mxu0 0.0
        %737 = vmatprep.subr.mxu0 0.0
        %738 = vmatpush2.msra.mxu0 0.0
        %739 = vmatprep.subr.mxu0 0.0
        %740 = vmatpush2.msra.mxu0 0.0
        %741 = vmatprep.subr.mxu0 0.0
        %742 = vmatpush2.msra.mxu0 0.0
        %743 = vmatprep.subr.mxu0 0.0
        %744 = vmatpush2.msra.mxu0 0.0
        %745 = vmatprep.subr.mxu0 0.0
        %746 = vmatpush2.msra.mxu0 0.0
        %747 = vmatprep.subr.mxu0 0.0
        %748 = vmatpush2.msra.mxu0 0.0
        %749 = vmatprep.subr.mxu0 0.0
        %750 = vmatpush2.msra.mxu0 0.0
        %751 = vmatprep.subr.mxu0 0.0
        %752 = vmatpush2.msra.mxu0 0.0
        %753 = vmatprep.subr.mxu0 0.0
        %754 = vmatpush2.msra.mxu0 0.0
        %755 = vmatprep.subr.mxu0 0.0
        %756 = vmatpush2.msra.mxu0 0.0
        %757 = vmatprep.subr.mxu0 0.0
        %758 = vmatpush2.msra.mxu0 0.0
        %759 = vmatprep.subr.mxu0 0.0
        %760 = vmatpush2.msra.mxu0 0.0
        %761 = vmatprep.subr.mxu0 0.0
        %762 = vmatpush2.msra.mxu0 0.0
        %763 = vmatprep.subr.mxu0 0.0
        %764 = vmatpush2.msra.mxu0 0.0
        %765 = vmatprep.mubr.f32.mxu0 0.0
        %766 = vmatmul.mubr.f32.gmra.mxu0 %v695
        %v767 = vpop.f32.mrf.mxu0
        %v768 = vadd.f32 0.0, %v767
        %v769 = vpop.f32.mrf.mxu0
        %v770 = vadd.f32 0.0, %v769
        %771 = vdwg.mxu0
        %v772 = vadd.f32 %v690, %v768
        %v773 = vadd.f32 %v691, %v770
        %774 = vrot.lane.b32.xlu0 %v277, 127
        %v775 = vpop.permute.xlu0 %774
        %776 = vrot.lane.b32.xlu0 %v310, 127
        %v777 = vpop.permute.xlu0 %776
        %vm778 = vcmask 1039360
        %v779 = vsel %vm778, %v775, %v777
        %v782 = vsel %vm778, %v777, 0.0
        %v783 = vsel %vm509, %v779, 0.0
        %v784 = vsel %vm510, %v782, 0.0
        %s785 = scalar_lea.vmem %s1, 40
        %v786 = vld [vmem:[%s785] sm:$0xff]
        %v788 = vsel %vm337, %v786, 0
        %v791 = vsel %vm341, %v783, 0
        %v794 = vsel %vm341, %v784, 0
        %796 = vmatprep.subr.mxu0 0.0
        %797 = vmatpush1.msra.mxu0 0.0
        %798 = vmatprep.subr.mxu0 0.0
        %799 = vmatpush1.msra.mxu0 0.0
        %800 = vmatprep.subr.mxu0 0.0
        %801 = vmatpush1.msra.mxu0 0.0
        %802 = vmatprep.subr.mxu0 0.0
        %803 = vmatpush1.msra.mxu0 0.0
        %804 = vmatprep.subr.mxu0 0.0
        %805 = vmatpush1.msra.mxu0 0.0
        %806 = vmatprep.subr.mxu0 0.0
        %807 = vmatpush1.msra.mxu0 0.0
        %808 = vmatprep.subr.mxu0 0.0
        %809 = vmatpush1.msra.mxu0 0.0
        %810 = vmatprep.subr.mxu0 0.0
        %811 = vmatpush1.msra.mxu0 0.0
        %812 = vmatprep.subr.mxu0 0.0
        %813 = vmatpush1.msra.mxu0 0.0
        %814 = vmatprep.subr.mxu0 0.0
        %815 = vmatpush1.msra.mxu0 0.0
        %816 = vmatprep.subr.mxu0 0.0
        %817 = vmatpush1.msra.mxu0 0.0
        %818 = vmatprep.subr.mxu0 0.0
        %819 = vmatpush1.msra.mxu0 0.0
        %820 = vmatprep.subr.mxu0 0.0
        %821 = vmatpush1.msra.mxu0 0.0
        %822 = vmatprep.subr.mxu0 0.0
        %823 = vmatpush1.msra.mxu0 0.0
        %824 = vmatprep.subr.mxu0 0.0
        %825 = vmatpush1.msra.mxu0 0.0
        %826 = vmatprep.subr.mxu0 %v794
        %827 = vmatpush1.msra.mxu0 %v791
        %828 = vmatprep.subr.mxu0 0.0
        %829 = vmatpush2.msra.mxu0 0.0
        %830 = vmatprep.subr.mxu0 0.0
        %831 = vmatpush2.msra.mxu0 0.0
        %832 = vmatprep.subr.mxu0 0.0
        %833 = vmatpush2.msra.mxu0 0.0
        %834 = vmatprep.subr.mxu0 0.0
        %835 = vmatpush2.msra.mxu0 0.0
        %836 = vmatprep.subr.mxu0 0.0
        %837 = vmatpush2.msra.mxu0 0.0
        %838 = vmatprep.subr.mxu0 0.0
        %839 = vmatpush2.msra.mxu0 0.0
        %840 = vmatprep.subr.mxu0 0.0
        %841 = vmatpush2.msra.mxu0 0.0
        %842 = vmatprep.subr.mxu0 0.0
        %843 = vmatpush2.msra.mxu0 0.0
        %844 = vmatprep.subr.mxu0 0.0
        %845 = vmatpush2.msra.mxu0 0.0
        %846 = vmatprep.subr.mxu0 0.0
        %847 = vmatpush2.msra.mxu0 0.0
        %848 = vmatprep.subr.mxu0 0.0
        %849 = vmatpush2.msra.mxu0 0.0
        %850 = vmatprep.subr.mxu0 0.0
        %851 = vmatpush2.msra.mxu0 0.0
        %852 = vmatprep.subr.mxu0 0.0
        %853 = vmatpush2.msra.mxu0 0.0
        %854 = vmatprep.subr.mxu0 0.0
        %855 = vmatpush2.msra.mxu0 0.0
        %856 = vmatprep.subr.mxu0 0.0
        %857 = vmatpush2.msra.mxu0 0.0
        %858 = vmatprep.subr.mxu0 0.0
        %859 = vmatpush2.msra.mxu0 0.0
        %860 = vmatprep.mubr.f32.mxu0 0.0
        %861 = vmatmul.mubr.f32.gmra.mxu0 %v788
        %v862 = vpop.f32.mrf.mxu0
        %v863 = vadd.f32 0.0, %v862
        %v864 = vpop.f32.mrf.mxu0
        %v865 = vadd.f32 0.0, %v864
        %866 = vdwg.mxu0
        %v867 = vadd.f32 %v772, %v863
        %v868 = vadd.f32 %v773, %v865
        %869 = vrot.lane.b32.xlu0 %v277, 113
        %v870 = vpop.permute.xlu0 %869
        %871 = vrot.lane.b32.xlu0 %v310, 113
        %v872 = vpop.permute.xlu0 %871
        %vm873 = vcmask 924672
        %v874 = vsel %vm873, %v870, %v872
        %v877 = vsel %vm873, %v872, 0.0
        %v878 = vsel %vm322, %v874, 0.0
        %v879 = vsel %vm323, %v877, 0.0
        %s880 = scalar_lea.vmem %s1, 48
        %v881 = vld [vmem:[%s880] sm:$0xff]
        %v883 = vsel %vm337, %v881, 0
        %v886 = vsel %vm341, %v878, 0
        %v889 = vsel %vm341, %v879, 0
        %891 = vmatprep.subr.mxu0 0.0
        %892 = vmatpush1.msra.mxu0 0.0
        %893 = vmatprep.subr.mxu0 0.0
        %894 = vmatpush1.msra.mxu0 0.0
        %895 = vmatprep.subr.mxu0 0.0
        %896 = vmatpush1.msra.mxu0 0.0
        %897 = vmatprep.subr.mxu0 0.0
        %898 = vmatpush1.msra.mxu0 0.0
        %899 = vmatprep.subr.mxu0 0.0
        %900 = vmatpush1.msra.mxu0 0.0
        %901 = vmatprep.subr.mxu0 0.0
        %902 = vmatpush1.msra.mxu0 0.0
        %903 = vmatprep.subr.mxu0 0.0
        %904 = vmatpush1.msra.mxu0 0.0
        %905 = vmatprep.subr.mxu0 0.0
        %906 = vmatpush1.msra.mxu0 0.0
        %907 = vmatprep.subr.mxu0 0.0
        %908 = vmatpush1.msra.mxu0 0.0
        %909 = vmatprep.subr.mxu0 0.0
        %910 = vmatpush1.msra.mxu0 0.0
        %911 = vmatprep.subr.mxu0 0.0
        %912 = vmatpush1.msra.mxu0 0.0
        %913 = vmatprep.subr.mxu0 0.0
        %914 = vmatpush1.msra.mxu0 0.0
        %915 = vmatprep.subr.mxu0 0.0
        %916 = vmatpush1.msra.mxu0 0.0
        %917 = vmatprep.subr.mxu0 0.0
        %918 = vmatpush1.msra.mxu0 0.0
        %919 = vmatprep.subr.mxu0 0.0
        %920 = vmatpush1.msra.mxu0 0.0
        %921 = vmatprep.subr.mxu0 %v889
        %922 = vmatpush1.msra.mxu0 %v886
        %923 = vmatprep.subr.mxu0 0.0
        %924 = vmatpush2.msra.mxu0 0.0
        %925 = vmatprep.subr.mxu0 0.0
        %926 = vmatpush2.msra.mxu0 0.0
        %927 = vmatprep.subr.mxu0 0.0
        %928 = vmatpush2.msra.mxu0 0.0
        %929 = vmatprep.subr.mxu0 0.0
        %930 = vmatpush2.msra.mxu0 0.0
        %931 = vmatprep.subr.mxu0 0.0
        %932 = vmatpush2.msra.mxu0 0.0
        %933 = vmatprep.subr.mxu0 0.0
        %934 = vmatpush2.msra.mxu0 0.0
        %935 = vmatprep.subr.mxu0 0.0
        %936 = vmatpush2.msra.mxu0 0.0
        %937 = vmatprep.subr.mxu0 0.0
        %938 = vmatpush2.msra.mxu0 0.0
        %939 = vmatprep.subr.mxu0 0.0
        %940 = vmatpush2.msra.mxu0 0.0
        %941 = vmatprep.subr.mxu0 0.0
        %942 = vmatpush2.msra.mxu0 0.0
        %943 = vmatprep.subr.mxu0 0.0
        %944 = vmatpush2.msra.mxu0 0.0
        %945 = vmatprep.subr.mxu0 0.0
        %946 = vmatpush2.msra.mxu0 0.0
        %947 = vmatprep.subr.mxu0 0.0
        %948 = vmatpush2.msra.mxu0 0.0
        %949 = vmatprep.subr.mxu0 0.0
        %950 = vmatpush2.msra.mxu0 0.0
        %951 = vmatprep.subr.mxu0 0.0
        %952 = vmatpush2.msra.mxu0 0.0
        %953 = vmatprep.subr.mxu0 0.0
        %954 = vmatpush2.msra.mxu0 0.0
        %955 = vmatprep.mubr.f32.mxu0 0.0
        %956 = vmatmul.mubr.f32.gmra.mxu0 %v883
        %v957 = vpop.f32.mrf.mxu0
        %v958 = vadd.f32 0.0, %v957
        %v959 = vpop.f32.mrf.mxu0
        %v960 = vadd.f32 0.0, %v959
        %961 = vdwg.mxu0
        %v962 = vadd.f32 %v867, %v958
        %v963 = vadd.f32 %v868, %v960
        %964 = vrot.lane.b32.xlu0 %v277, 112
        %v965 = vpop.permute.xlu0 %964
        %966 = vrot.lane.b32.xlu0 %v310, 112
        %v967 = vpop.permute.xlu0 %966
        %vm968 = vcmask 916480
        %v969 = vsel %vm968, %v965, %v967
        %v971 = vsel %vm968, %v967, 0.0
        %s972 = scalar_lea.vmem %s1, 56
        %v973 = vld [vmem:[%s972] sm:$0xff]
        %v975 = vsel %vm337, %v973, 0
        %v977 = vsel %vm341, %v969, 0
        %v980 = vsel %vm341, %v971, 0
        %982 = vmatprep.subr.mxu0 0.0
        %983 = vmatpush1.msra.mxu0 0.0
        %984 = vmatprep.subr.mxu0 0.0
        %985 = vmatpush1.msra.mxu0 0.0
        %986 = vmatprep.subr.mxu0 0.0
        %987 = vmatpush1.msra.mxu0 0.0
        %988 = vmatprep.subr.mxu0 0.0
        %989 = vmatpush1.msra.mxu0 0.0
        %990 = vmatprep.subr.mxu0 0.0
        %991 = vmatpush1.msra.mxu0 0.0
        %992 = vmatprep.subr.mxu0 0.0
        %993 = vmatpush1.msra.mxu0 0.0
        %994 = vmatprep.subr.mxu0 0.0
        %995 = vmatpush1.msra.mxu0 0.0
        %996 = vmatprep.subr.mxu0 0.0
        %997 = vmatpush1.msra.mxu0 0.0
        %998 = vmatprep.subr.mxu0 0.0
        %999 = vmatpush1.msra.mxu0 0.0
        %1000 = vmatprep.subr.mxu0 0.0
        %1001 = vmatpush1.msra.mxu0 0.0
        %1002 = vmatprep.subr.mxu0 0.0
        %1003 = vmatpush1.msra.mxu0 0.0
        %1004 = vmatprep.subr.mxu0 0.0
        %1005 = vmatpush1.msra.mxu0 0.0
        %1006 = vmatprep.subr.mxu0 0.0
        %1007 = vmatpush1.msra.mxu0 0.0
        %1008 = vmatprep.subr.mxu0 0.0
        %1009 = vmatpush1.msra.mxu0 0.0
        %1010 = vmatprep.subr.mxu0 0.0
        %1011 = vmatpush1.msra.mxu0 0.0
        %1012 = vmatprep.subr.mxu0 %v980
        %1013 = vmatpush1.msra.mxu0 %v977
        %1014 = vmatprep.subr.mxu0 0.0
        %1015 = vmatpush2.msra.mxu0 0.0
        %1016 = vmatprep.subr.mxu0 0.0
        %1017 = vmatpush2.msra.mxu0 0.0
        %1018 = vmatprep.subr.mxu0 0.0
        %1019 = vmatpush2.msra.mxu0 0.0
        %1020 = vmatprep.subr.mxu0 0.0
        %1021 = vmatpush2.msra.mxu0 0.0
        %1022 = vmatprep.subr.mxu0 0.0
        %1023 = vmatpush2.msra.mxu0 0.0
        %1024 = vmatprep.subr.mxu0 0.0
        %1025 = vmatpush2.msra.mxu0 0.0
        %1026 = vmatprep.subr.mxu0 0.0
        %1027 = vmatpush2.msra.mxu0 0.0
        %1028 = vmatprep.subr.mxu0 0.0
        %1029 = vmatpush2.msra.mxu0 0.0
        %1030 = vmatprep.subr.mxu0 0.0
        %1031 = vmatpush2.msra.mxu0 0.0
        %1032 = vmatprep.subr.mxu0 0.0
        %1033 = vmatpush2.msra.mxu0 0.0
        %1034 = vmatprep.subr.mxu0 0.0
        %1035 = vmatpush2.msra.mxu0 0.0
        %1036 = vmatprep.subr.mxu0 0.0
        %1037 = vmatpush2.msra.mxu0 0.0
        %1038 = vmatprep.subr.mxu0 0.0
        %1039 = vmatpush2.msra.mxu0 0.0
        %1040 = vmatprep.subr.mxu0 0.0
        %1041 = vmatpush2.msra.mxu0 0.0
        %1042 = vmatprep.subr.mxu0 0.0
        %1043 = vmatpush2.msra.mxu0 0.0
        %1044 = vmatprep.subr.mxu0 0.0
        %1045 = vmatpush2.msra.mxu0 0.0
        %1046 = vmatprep.mubr.f32.mxu0 0.0
        %1047 = vmatmul.mubr.f32.gmra.mxu0 %v975
        %v1048 = vpop.f32.mrf.mxu0
        %v1049 = vadd.f32 0.0, %v1048
        %v1050 = vpop.f32.mrf.mxu0
        %v1051 = vadd.f32 0.0, %v1050
        %1052 = vdwg.mxu0
        %v1053 = vadd.f32 %v962, %v1049
        %v1054 = vadd.f32 %v963, %v1051
        %1055 = vrot.lane.b32.xlu0 %v277, 111
        %v1056 = vpop.permute.xlu0 %1055
        %1057 = vrot.lane.b32.xlu0 %v310, 111
        %v1058 = vpop.permute.xlu0 %1057
        %vm1059 = vcmask 908288
        %v1060 = vsel %vm1059, %v1056, %v1058
        %v1063 = vsel %vm1059, %v1058, 0.0
        %v1064 = vsel %vm509, %v1060, 0.0
        %v1065 = vsel %vm510, %v1063, 0.0
        %s1066 = scalar_lea.vmem %s1, 64
        %v1067 = vld [vmem:[%s1066] sm:$0xff]
        %v1069 = vsel %vm337, %v1067, 0
        %v1072 = vsel %vm341, %v1064, 0
        %v1075 = vsel %vm341, %v1065, 0
        %1077 = vmatprep.subr.mxu0 0.0
        %1078 = vmatpush1.msra.mxu0 0.0
        %1079 = vmatprep.subr.mxu0 0.0
        %1080 = vmatpush1.msra.mxu0 0.0
        %1081 = vmatprep.subr.mxu0 0.0
        %1082 = vmatpush1.msra.mxu0 0.0
        %1083 = vmatprep.subr.mxu0 0.0
        %1084 = vmatpush1.msra.mxu0 0.0
        %1085 = vmatprep.subr.mxu0 0.0
        %1086 = vmatpush1.msra.mxu0 0.0
        %1087 = vmatprep.subr.mxu0 0.0
        %1088 = vmatpush1.msra.mxu0 0.0
        %1089 = vmatprep.subr.mxu0 0.0
        %1090 = vmatpush1.msra.mxu0 0.0
        %1091 = vmatprep.subr.mxu0 0.0
        %1092 = vmatpush1.msra.mxu0 0.0
        %1093 = vmatprep.subr.mxu0 0.0
        %1094 = vmatpush1.msra.mxu0 0.0
        %1095 = vmatprep.subr.mxu0 0.0
        %1096 = vmatpush1.msra.mxu0 0.0
        %1097 = vmatprep.subr.mxu0 0.0
        %1098 = vmatpush1.msra.mxu0 0.0
        %1099 = vmatprep.subr.mxu0 0.0
        %1100 = vmatpush1.msra.mxu0 0.0
        %1101 = vmatprep.subr.mxu0 0.0
        %1102 = vmatpush1.msra.mxu0 0.0
        %1103 = vmatprep.subr.mxu0 0.0
        %1104 = vmatpush1.msra.mxu0 0.0
        %1105 = vmatprep.subr.mxu0 0.0
        %1106 = vmatpush1.msra.mxu0 0.0
        %1107 = vmatprep.subr.mxu0 %v1075
        %1108 = vmatpush1.msra.mxu0 %v1072
        %1109 = vmatprep.subr.mxu0 0.0
        %1110 = vmatpush2.msra.mxu0 0.0
        %1111 = vmatprep.subr.mxu0 0.0
        %1112 = vmatpush2.msra.mxu0 0.0
        %1113 = vmatprep.subr.mxu0 0.0
        %1114 = vmatpush2.msra.mxu0 0.0
        %1115 = vmatprep.subr.mxu0 0.0
        %1116 = vmatpush2.msra.mxu0 0.0
        %1117 = vmatprep.subr.mxu0 0.0
        %1118 = vmatpush2.msra.mxu0 0.0
        %1119 = vmatprep.subr.mxu0 0.0
        %1120 = vmatpush2.msra.mxu0 0.0
        %1121 = vmatprep.subr.mxu0 0.0
        %1122 = vmatpush2.msra.mxu0 0.0
        %1123 = vmatprep.subr.mxu0 0.0
        %1124 = vmatpush2.msra.mxu0 0.0
        %1125 = vmatprep.subr.mxu0 0.0
        %1126 = vmatpush2.msra.mxu0 0.0
        %1127 = vmatprep.subr.mxu0 0.0
        %1128 = vmatpush2.msra.mxu0 0.0
        %1129 = vmatprep.subr.mxu0 0.0
        %1130 = vmatpush2.msra.mxu0 0.0
        %1131 = vmatprep.subr.mxu0 0.0
        %1132 = vmatpush2.msra.mxu0 0.0
        %1133 = vmatprep.subr.mxu0 0.0
        %1134 = vmatpush2.msra.mxu0 0.0
        %1135 = vmatprep.subr.mxu0 0.0
        %1136 = vmatpush2.msra.mxu0 0.0
        %1137 = vmatprep.subr.mxu0 0.0
        %1138 = vmatpush2.msra.mxu0 0.0
        %1139 = vmatprep.subr.mxu0 0.0
        %1140 = vmatpush2.msra.mxu0 0.0
        %1141 = vmatprep.mubr.f32.mxu0 0.0
        %1142 = vmatmul.mubr.f32.gmra.mxu0 %v1069
        %v1143 = vpop.f32.mrf.mxu0
        %v1144 = vadd.f32 0.0, %v1143
        %v1145 = vpop.f32.mrf.mxu0
        %v1146 = vadd.f32 0.0, %v1145
        %1147 = vdwg.mxu0
        %v1148 = vadd.f32 %v1053, %v1144
        %v1149 = vadd.f32 %v1054, %v1146
        %v1150 = vld [vmem:[%s2] sm:$0xff]
        %1152 = vset.pattern.permute.xlu0 0
        %1153 = vperm.xlu0 %1152, %v1150
        %v1154 = vpop.permute.xlu0 %1153
        %v1156 = vmul.f32 %v1148, %v1154
        %v1157 = vmul.f32 %v1149, %v1154
        %v1158 = vld [vmem:[%s3] sm:$0xff]
        %1160 = vset.pattern.permute.xlu0 0
        %1161 = vperm.xlu0 %1160, %v1158
        %v1162 = vpop.permute.xlu0 %1161
        %v1164 = vadd.f32 %v1156, %v1162
        %v1165 = vadd.f32 %v1157, %v1162
        %v1166 = vmax.f32 %v1164, 0.0
        %v1167 = vmax.f32 %v1165, 0.0
        %v1168 = vadd.f32 %v1166, %v1167
        %1169 = vadd.xlane.f32.xlu0 %v1168
        %v1170 = vpop.xlane.xlu0 %1169
        %v1171 = vmul.f32 %v1170, 0.00390625
        %v1172 = vld [vmem:[%s4] sm:$0xff]
        %vm1173 = vcmask 64512
        %v1175 = vsel %vm1173, %v1172, 0
        %1177 = vmatprep.subr.mxu0 0.0
        %1178 = vmatpush1.msra.mxu0 0.0
        %1179 = vmatprep.subr.mxu0 0.0
        %1180 = vmatpush1.msra.mxu0 0.0
        %1181 = vmatprep.subr.mxu0 0.0
        %1182 = vmatpush1.msra.mxu0 0.0
        %1183 = vmatprep.subr.mxu0 0.0
        %1184 = vmatpush1.msra.mxu0 0.0
        %1185 = vmatprep.subr.mxu0 0.0
        %1186 = vmatpush1.msra.mxu0 0.0
        %1187 = vmatprep.subr.mxu0 0.0
        %1188 = vmatpush1.msra.mxu0 0.0
        %1189 = vmatprep.subr.mxu0 0.0
        %1190 = vmatpush1.msra.mxu0 0.0
        %1191 = vmatprep.subr.mxu0 0.0
        %1192 = vmatpush1.msra.mxu0 0.0
        %1193 = vmatprep.subr.mxu0 0.0
        %1194 = vmatpush1.msra.mxu0 0.0
        %1195 = vmatprep.subr.mxu0 0.0
        %1196 = vmatpush1.msra.mxu0 0.0
        %1197 = vmatprep.subr.mxu0 0.0
        %1198 = vmatpush1.msra.mxu0 0.0
        %1199 = vmatprep.subr.mxu0 0.0
        %1200 = vmatpush1.msra.mxu0 0.0
        %1201 = vmatprep.subr.mxu0 0.0
        %1202 = vmatpush1.msra.mxu0 0.0
        %1203 = vmatprep.subr.mxu0 0.0
        %1204 = vmatpush1.msra.mxu0 0.0
        %1205 = vmatprep.subr.mxu0 0.0
        %1206 = vmatpush1.msra.mxu0 0.0
        %1207 = vmatprep.subr.mxu0 0.0
        %1208 = vmatpush1.msra.mxu0 %v1171
        %1209 = vmatprep.subr.mxu0 0.0
        %1210 = vmatpush2.msra.mxu0 0.0
        %1211 = vmatprep.subr.mxu0 0.0
        %1212 = vmatpush2.msra.mxu0 0.0
        %1213 = vmatprep.subr.mxu0 0.0
        %1214 = vmatpush2.msra.mxu0 0.0
        %1215 = vmatprep.subr.mxu0 0.0
        %1216 = vmatpush2.msra.mxu0 0.0
        %1217 = vmatprep.subr.mxu0 0.0
        %1218 = vmatpush2.msra.mxu0 0.0
        %1219 = vmatprep.subr.mxu0 0.0
        %1220 = vmatpush2.msra.mxu0 0.0
        %1221 = vmatprep.subr.mxu0 0.0
        %1222 = vmatpush2.msra.mxu0 0.0
        %1223 = vmatprep.subr.mxu0 0.0
        %1224 = vmatpush2.msra.mxu0 0.0
        %1225 = vmatprep.subr.mxu0 0.0
        %1226 = vmatpush2.msra.mxu0 0.0
        %1227 = vmatprep.subr.mxu0 0.0
        %1228 = vmatpush2.msra.mxu0 0.0
        %1229 = vmatprep.subr.mxu0 0.0
        %1230 = vmatpush2.msra.mxu0 0.0
        %1231 = vmatprep.subr.mxu0 0.0
        %1232 = vmatpush2.msra.mxu0 0.0
        %1233 = vmatprep.subr.mxu0 0.0
        %1234 = vmatpush2.msra.mxu0 0.0
        %1235 = vmatprep.subr.mxu0 0.0
        %1236 = vmatpush2.msra.mxu0 0.0
        %1237 = vmatprep.subr.mxu0 0.0
        %1238 = vmatpush2.msra.mxu0 0.0
        %1239 = vmatprep.subr.mxu0 0.0
        %1240 = vmatpush2.msra.mxu0 0.0
        %1241 = vmatprep.mubr.f32.mxu0 0.0
        %1242 = vmatmul.mubr.f32.gmra.mxu0 %v1175
        %v1243 = vpop.f32.mrf.mxu0
        %v1244 = vadd.f32 0.0, %v1243
        %v1245 = vpop.f32.mrf.mxu0
        %1246 = vdwg.mxu0
        %v1247 = vld [vmem:[%s5] sm:$0xff]
        %v1248 = vmul.f32 %v1244, %v1247
        %v1249 = vld [vmem:[%s6] sm:$0xff]
        %v1250 = vadd.f32 %v1248, %v1249
        %v1251 = vxor.u32 %v1250, 2147483648
        %v1252 = vmul.f32 %v1251, 1.442695
        %v1253 = vpow.pop %v1252
        %v1254 = vadd.f32 %v1253, 1.0
        %v1255 = vrcp.pop %v1254
        %v1256 = vmul.f32 1.0, %v1255
        %1258 = vset.pattern.permute.xlu0 0
        %1259 = vperm.xlu0 %1258, %v1256
        %v1260 = vpop.permute.xlu0 %1259
        %v1262 = vmul.f32 %v1166, %v1260
        %v1263 = vmul.f32 %v1167, %v1260
        %1264 = vst [vmem:[%s271] sm:$0xff] %v1262
        %1265 = vst [vmem:[%s271 + $0x8] sm:$0xff] %v1263
        %s1266 = sand.u32 %s181, 1
        %s1267 = scalar_lea.sflag [#allocation3], %s1266
        %s1268 = sand.u32 %s181, 1
        %s1269 = smul.addr %s1268, 16
        %s1270 = scalar_lea.vmem [#allocation2], %s1269
        // Predicated region
        $region49: #{tpu_custom_call.1} parent=47 // pred_check
          %p1271 = pneg %p191
        $region50: #{tpu_custom_call.1} parent=47 // pred_check_branch
          %1273 = sbr.rel (%p1271) target = $region52
        $region51: #{tpu_custom_call.1} parent=47 // pred_region
          %s1275 = ssub.s32 256, 256
          %1276 = vsyncadd %s1267, %s1275
          %s1277 = smul.addr %s21, 2
          %s1278 = smul.addr %s1277, 128
          %s1279 = scalar_lea.hbm %s7, %s1278
          %s1281 = sshll.u32 %s1270, 4
          %s1282 = int_to_ptr.vmem [resolvable:$true] %s1281
          %1284 = dma.vmem_to_hbm [thread:$0]  %s1282, 256, %s1279, %s1267
        $region52: #{tpu_custom_call.1} parent=47 // pred_fallthru
          _
      $region48: #{tpu_custom_call.1} parent=5 // pred_fallthru
        _
      %p1285 = scmp.le.s32.totalorder 2, %s16
      // Predicated region
      $region53: #{tpu_custom_call.1} parent=5 // pred_check
        %p1286 = pneg %p1285
      $region54: #{tpu_custom_call.1} parent=5 // pred_check_branch
        %1288 = sbr.rel (%p1286) target = $region56
      $region55: #{tpu_custom_call.1} parent=5 // pred_region
        %s1289 = ssub.s32 %s16, 2
        // Predicated region
        $region57: #{tpu_custom_call.1} parent=55 // pred_check
          %p1290 = pneg %p197
        $region58: #{tpu_custom_call.1} parent=55 // pred_check_branch
          %1292 = sbr.rel (%p1290) target = $region60
        $region59: #{tpu_custom_call.1} parent=55 // pred_region
          %s1293 = sand.u32 %s182, 1
          %s1294 = scalar_lea.sflag [#allocation3], %s1293
          %s1295 = sand.u32 %s182, 1
          %s1296 = smul.addr %s1295, 16
          %s1297 = scalar_lea.vmem [#allocation2], %s1296
          %1298 = dma.done %s1294, 256
        $region60: #{tpu_custom_call.1} parent=55 // pred_fallthru
          _
      $region56: #{tpu_custom_call.1} parent=5 // pred_fallthru
        _
    $region6: #{tpu_custom_call.1} parent=1 // loop_footer
      %s20 = sadd.s32 1, %s16
    $region7: #{tpu_custom_call.1} parent=1 // loop_footer_branch
      %15 = sbr.rel target = $region3
    $region8: #{tpu_custom_call.1} parent=1 // loop_exit
      _
    %1299 = vsyncpa [#allocation3], 1
    %s1300 = scalar_lea.sflag [#allocation3], 1
    %1301 = vsyncpa %s1300, 1

</llo_original>
